<compile_context>
chip_gen: v7x
topology: tpu7x:2x2x1
jax: 0.10.0
libtpu: 0.0.40
codegen_flags: <defaults>
</compile_context>

<pallas_src>
import functools
import math

import jax
import jax.numpy as jnp
import numpy as np
from jax import lax
from jax.experimental import pallas as pl
from jax.experimental.pallas import tpu as pltpu

EPS = 1e-8                      # PixelNorm eps buffer
GAIN = 1.0 / math.sqrt(2.0)     # register_buffer('gain', rsqrt(2.0))
K1 = (0.125, 0.375, 0.375, 0.125)   # [1, 3, 3, 1] / 8 — separable FIR taps


def _encode_block_kernel(x_ref, w1_ref, b1_ref, w2_ref, b2_ref, wsc_ref, bw_ref,
                         out_ref, pat_ref, *, c_real, h, w):
    cp = x_ref.shape[1]
    hw = h * w
    ho = h // 2
    inv_c = 1.0 / c_real

    # Horizontal-border validity masks for the dx = -1 / +1 taps (built once per grid step).
    col = lax.broadcasted_iota(jnp.int32, (1, hw), 1) % w
    mask_m1 = (col >= 1).astype(jnp.float32)          # value at p comes from p - 1
    mask_p1 = (col < (w - 1)).astype(jnp.float32)     # value at p comes from p + 1

    # Zero the one-row top/bottom pads of the patch scratch. The conv stores below only touch
    # lanes [w, w+hw), so these pads implement the dy = +/-1 zero padding with no masks.
    zpad = jnp.zeros((3 * cp, w), jnp.bfloat16)
    pat_ref[:, 0:w] = zpad
    pat_ref[:, w + hw:w + hw + w] = zpad

    def pn_lrelu(v):
        # PixelNorm over the *real* channel count (padded rows are zero) + LeakyReLU(0.2).
        m = jnp.sum(v * v, axis=0, keepdims=True) * inv_c
        v = v * lax.rsqrt(m + EPS)
        return jnp.maximum(v, 0.2 * v)

    def conv3x3(act, w3_ref, bias):
        # act: (cp, hw) f32.  K-split 3x3 "same" conv:
        #   - 2 XLU rolls build the dx = -1 / +1 shifted copies (dx = 0 is `act` itself),
        #   - the (3*cp, hw) dx-concatenated bf16 block is parked in the zero-padded scratch,
        #   - each dy tap is a static lane-offset read + one MXU dot with f32 accumulation.
        d_m1 = (pltpu.roll(act, shift=1, axis=1) * mask_m1).astype(jnp.bfloat16)
        d_p1 = (pltpu.roll(act, shift=hw - 1, axis=1) * mask_p1).astype(jnp.bfloat16)
        pat_ref[:, w:w + hw] = jnp.concatenate(
            [d_m1, act.astype(jnp.bfloat16), d_p1], axis=0)
        res = bias                                            # (rows, 1) f32, broadcasts
        for ky in range(3):                                   # dy = ky - 1
            rhs = pat_ref[:, ky * w:ky * w + hw]              # (3*cp, hw) bf16, static offset
            res = res + jnp.dot(w3_ref[ky], rhs, preferred_element_type=jnp.float32)
        return res

    x_bf = x_ref[0]                                           # (cp, hw) bf16
    x = x_bf.astype(jnp.float32)

    # Residual branch: PixelNorm -> LeakyReLU -> conv3x3 -> PixelNorm -> LeakyReLU -> conv3x3.
    t = pn_lrelu(x)
    r = conv3x3(t, w1_ref, b1_ref[...])                       # (cp, hw)
    t = pn_lrelu(r)
    r = conv3x3(t, w2_ref, b2_ref[...])                       # (op, hw)

    # Shortcut branch: 1x1 conv (no bias) straight off the bf16 input.
    s = jnp.dot(wsc_ref[...], x_bf, preferred_element_type=jnp.float32)   # (op, hw)

    u = s + r                                                 # (op, hw) f32

    # Separable Blur([1,3,3,1]) + stride-2 downsample, kept in f32 (no dense (hw, ho*wo) matrix):
    #   H direction: 4-tap FIR + decimate via static row slices and FMAs,
    #   W direction: one tiny (w, wo) matmul per output row, lane-concatenated to (op, ho*wo).
    bw = bw_ref[...]                                          # (w, wo) f32, hoisted
    rows = [u[:, hh * w:(hh + 1) * w] for hh in range(h)]     # h x (op, w)
    pieces = []
    for i in range(ho):
        acc = None
        for tap in range(4):
            hh = 2 * i + tap - 1
            if 0 <= hh < h:
                term = K1[tap] * rows[hh]
                acc = term if acc is None else acc + term
        pieces.append(jnp.dot(acc, bw, preferred_element_type=jnp.float32))   # (op, wo)
    y = jnp.concatenate(pieces, axis=1)                       # (op, ho*wo)

    out_ref[0] = (GAIN * y).astype(out_ref.dtype)


def _conv3x3_weight(wt, c_pad):
    """(O, C, 3, 3) torch-layout weight -> (3, O, 3*c_pad): index [ky][o, kx*c_pad + c]."""
    o, c, kh, kw = wt.shape
    wt = jnp.transpose(wt, (0, 2, 3, 1))                       # (O, ky, kx, C)
    wt = jnp.pad(wt, ((0, 0), (0, 0), (0, 0), (0, c_pad - c)))
    wt = wt.reshape(o, kh, kw * c_pad)
    return jnp.transpose(wt, (1, 0, 2))                        # (3, O, 3*c_pad)


def _fir_down_matrix(n):
    """(n, n//2) matrix: 1-D FIR [1,3,3,1]/8, stride 2, pad (1,1) along one spatial axis."""
    k1 = np.array([1.0, 3.0, 3.0, 1.0], np.float64)
    k1 /= k1.sum()
    m = np.zeros((n, n // 2), np.float32)
    for j in range(n // 2):
        for tap in range(4):
            p = 2 * j + tap - 1
            if 0 <= p < n:
                m[p, j] = k1[tap]
    return m


def encode_block(x, w1, b1, w2, b2, wsc=None, *, downsample=True):
    """x: (B, C, H, W); w1/b1: conv3x3 C->C; w2/b2: conv3x3 C->O; wsc: conv1x1 C->O (no bias)."""
    assert downsample, "TODO(synk): downsample=False path not implemented"
    B, C, H, W = x.shape
    O = w2.shape[0]
    assert H % 2 == 0 and W % 2 == 0
    if wsc is None:
        assert C == O, "identity shortcut requires in_channels == out_channels"
    HW, Ho, Wo = H * W, H // 2, W // 2
    Cp = ((C + 15) // 16) * 16          # bf16 sublane-tile aligned channel count
    Op = ((O + 7) // 8) * 8

    # --- one-time parameter / layout glue (plain JAX, outside the hot kernel) ---
    w1m = jnp.pad(_conv3x3_weight(w1, Cp),
                  ((0, 0), (0, Cp - C), (0, 0))).astype(jnp.bfloat16)       # (3, Cp, 3Cp)
    w2m = jnp.pad(_conv3x3_weight(w2, Cp),
                  ((0, 0), (0, Op - O), (0, 0))).astype(jnp.bfloat16)       # (3, Op, 3Cp)
    b1p = jnp.pad(b1, (0, Cp - C)).reshape(Cp, 1).astype(jnp.float32)
    b2p = jnp.pad(b2, (0, Op - O)).reshape(Op, 1).astype(jnp.float32)
    if wsc is None:
        wscm = jnp.eye(Op, Cp, dtype=jnp.bfloat16)
    else:
        wscm = jnp.pad(wsc.reshape(O, C),
                       ((0, Op - O), (0, Cp - C))).astype(jnp.bfloat16)     # (Op, Cp)
    bw = jnp.asarray(_fir_down_matrix(W), jnp.float32)                      # (W, Wo)
    xf = jnp.pad(x, ((0, 0), (0, Cp - C), (0, 0), (0, 0))
                 ).reshape(B, Cp, HW).astype(jnp.bfloat16)                  # bf16 streamed input

    # Explicit scoped-VMEM budget sized from the per-step working set, capped below v7x's 64 MiB.
    work = (2 * Cp * HW * 2                      # streamed input (double-buffered, bf16)
            + 2 * Op * Ho * Wo * 4               # output (double-buffered, f32)
            + 3 * Cp * (HW + 2 * W) * 2          # patch scratch (bf16)
            + (3 * Cp + 3 * Op) * 3 * Cp * 2     # resident conv weights (single-buffered)
            + Op * Cp * 2 + (Cp + Op) * 4 + W * Wo * 4
            + 8 * Cp * HW * 4)                   # live f32 activations / accumulators
    vmem_limit = int(min(max(2 * work, 4 << 20), 48 << 20))

    kernel = functools.partial(_encode_block_kernel, c_real=C, h=H, w=W)
    resident = dict(pipeline_mode=pl.Buffered(1))   # constant blocks: single-buffered residents
    out = pl.pallas_call(
        kernel,
        out_shape=jax.ShapeDtypeStruct((B, Op, Ho * Wo), jnp.float32),
        grid_spec=pltpu.PrefetchScalarGridSpec(
            num_scalar_prefetch=0,
            grid=(B,),
            in_specs=[
                pl.BlockSpec((1, Cp, HW), lambda b: (b, 0, 0)),             # per-batch input
                pl.BlockSpec((3, Cp, 3 * Cp), lambda b: (0, 0, 0), **resident),  # conv1 weight
                pl.BlockSpec((Cp, 1), lambda b: (0, 0), **resident),             # conv1 bias
                pl.BlockSpec((3, Op, 3 * Cp), lambda b: (0, 0, 0), **resident),  # conv2 weight
                pl.BlockSpec((Op, 1), lambda b: (0, 0), **resident),             # conv2 bias
                pl.BlockSpec((Op, Cp), lambda b: (0, 0), **resident),            # shortcut 1x1
                pl.BlockSpec((W, Wo), lambda b: (0, 0), **resident),             # 1-D FIR/stride2
            ],
            out_specs=pl.BlockSpec((1, Op, Ho * Wo), lambda b: (b, 0, 0)),
            scratch_shapes=[pltpu.VMEM((3 * Cp, HW + 2 * W), jnp.bfloat16)],
        ),
        compiler_params=pltpu.CompilerParams(
            dimension_semantics=("parallel",),
            vmem_limit_bytes=vmem_limit),
    )(xf, w1m, b1p, w2m, b2p, wscm, bw)
    return out.reshape(B, Op, Ho, Wo)[:, :O]


def _reference(x, w1, b1, w2, b2, wsc):
    """Pure-JAX mirror of the PyTorch EncodeBlock forward (downsample=True)."""
    dn = ('NCHW', 'OIHW', 'NCHW')

    def pn_act(v):
        m = jnp.mean(jnp.square(v), axis=1, keepdims=True)
        v = v * lax.rsqrt(m + EPS)
        return jnp.where(v >= 0.0, v, 0.2 * v)

    r = pn_act(x)
    r = lax.conv_general_dilated(r, w1, (1, 1), [(1, 1), (1, 1)], dimension_numbers=dn)
    r = r + b1[None, :, None, None]
    r = pn_act(r)
    r = lax.conv_general_dilated(r, w2, (1, 1), [(1, 1), (1, 1)], dimension_numbers=dn)
    r = r + b2[None, :, None, None]
    s = lax.conv_general_dilated(x, wsc, (1, 1), [(0, 0), (0, 0)], dimension_numbers=dn)
    u = s + r
    k1 = jnp.array([1.0, 3.0, 3.0, 1.0], jnp.float32) / 8.0
    k2 = jnp.outer(k1, k1)
    Cout = u.shape[1]
    kd = jnp.tile(k2[None, None], (Cout, 1, 1, 1))              # depthwise 4x4 blur
    out = lax.conv_general_dilated(u, kd, (2, 2), [(1, 1), (1, 1)],
                                   dimension_numbers=dn, feature_group_count=Cout)
    return GAIN * out


if __name__ == "__main__":
    B, C_in, C_out, H, W = 2, 4, 8, 16, 16

    key = jax.random.PRNGKey(0)
    ks = jax.random.split(key, 6)
    w1 = jax.random.normal(ks[0], (C_in, C_in, 3, 3), jnp.float32) / math.sqrt(9 * C_in)
    b1 = 0.1 * jax.random.normal(ks[1], (C_in,), jnp.float32)
    w2 = jax.random.normal(ks[2], (C_out, C_in, 3, 3), jnp.float32) / math.sqrt(9 * C_in)
    b2 = 0.1 * jax.random.normal(ks[3], (C_out,), jnp.float32)
    wsc = jax.random.normal(ks[4], (C_out, C_in, 1, 1), jnp.float32) / math.sqrt(C_in)
    x = jax.random.normal(ks[5], (B, C_in, H, W), jnp.float32)

    out = encode_block(x, w1, b1, w2, b2, wsc)
    out = jax.block_until_ready(out)

    ref = _reference(x, w1, b1, w2, b2, wsc)
    # bf16 input / bf16 MXU operands with f32 accumulation -> relaxed tolerance vs f32 reference.
    np.testing.assert_allclose(np.asarray(out), np.asarray(ref), rtol=5e-2, atol=5e-2)

    print("KERNEL_OK")
</pallas_src>

<mosaic_0001>
module attributes {stable_mosaic.version = 11 : i64} {
  func.func @_encode_block_kernel(%arg0: i32, %arg1: memref<1x16x256xbf16, #tpu.memory_space<vmem>>, %arg2: memref<3x16x48xbf16, #tpu.memory_space<vmem>>, %arg3: memref<16x1xf32, #tpu.memory_space<vmem>>, %arg4: memref<3x8x48xbf16, #tpu.memory_space<vmem>>, %arg5: memref<8x1xf32, #tpu.memory_space<vmem>>, %arg6: memref<8x16xbf16, #tpu.memory_space<vmem>>, %arg7: memref<16x8xf32, #tpu.memory_space<vmem>>, %arg8: memref<1x8x64xf32, #tpu.memory_space<vmem>>, %arg9: memref<48x288xbf16, #tpu.memory_space<vmem>>) attributes {dimension_semantics = [#tpu.dimension_semantics<parallel>], iteration_bounds = array<i64: 2>, scalar_prefetch = 0 : i64, scratch_operands = 1 : i64, tpu.core_type = #tpu.core_type<tc>, window_params = [{transform_indices = @transform_0, window_bounds = array<i64: 1, 16, 256>}, {pipeline_mode = #tpu.pipeline_mode<synchronous>, transform_indices = @transform_1, window_bounds = array<i64: 3, 16, 48>}, {pipeline_mode = #tpu.pipeline_mode<synchronous>, transform_indices = @transform_2, window_bounds = array<i64: 16, 1>}, {pipeline_mode = #tpu.pipeline_mode<synchronous>, transform_indices = @transform_3, window_bounds = array<i64: 3, 8, 48>}, {pipeline_mode = #tpu.pipeline_mode<synchronous>, transform_indices = @transform_4, window_bounds = array<i64: 8, 1>}, {pipeline_mode = #tpu.pipeline_mode<synchronous>, transform_indices = @transform_5, window_bounds = array<i64: 8, 16>}, {pipeline_mode = #tpu.pipeline_mode<synchronous>, transform_indices = @transform_6, window_bounds = array<i64: 16, 8>}, {transform_indices = @transform_7, window_bounds = array<i64: 1, 8, 64>}]} {
    %0 = tpu.iota {dimensions = array<i32: 1>} : vector<1x256xi32>
    %c16_i32 = arith.constant 16 : i32
    %c0_i32 = arith.constant 0 : i32
    %1 = arith.cmpi eq, %c16_i32, %c0_i32 : i32
    %c1_i32 = arith.constant 1 : i32
    %2 = arith.select %1, %c1_i32, %c16_i32 : i32
    %3 = vector.broadcast %2 : i32 to vector<1x256xi32>
    %4 = arith.remsi %0, %3 : vector<1x256xi32>
    %c0_i32_0 = arith.constant 0 : i32
    %5 = vector.broadcast %c0_i32_0 : i32 to vector<1x256xi32>
    %6 = arith.cmpi ne, %4, %5 : vector<1x256xi32>
    %c0_i32_1 = arith.constant 0 : i32
    %7 = vector.broadcast %c0_i32_1 : i32 to vector<1x256xi32>
    %8 = arith.cmpi slt, %4, %7 : vector<1x256xi32>
    %c0_i32_2 = arith.constant 0 : i32
    %9 = arith.cmpi slt, %2, %c0_i32_2 : i32
    %10 = vector.broadcast %9 : i1 to vector<1x256xi1>
    %11 = vector.broadcast %10 : vector<1x256xi1> to vector<1x256xi1>
    %12 = arith.xori %8, %11 : vector<1x256xi1>
    %13 = arith.andi %12, %6 : vector<1x256xi1>
    %14 = vector.broadcast %2 : i32 to vector<1x256xi32>
    %15 = arith.addi %4, %14 : vector<1x256xi32>
    %16 = arith.select %13, %15, %4 : vector<1x256xi1>, vector<1x256xi32>
    %c1_i32_3 = arith.constant 1 : i32
    %17 = vector.broadcast %c1_i32_3 : i32 to vector<1x256xi32>
    %18 = arith.cmpi sge, %16, %17 : vector<1x256xi32>
    %19 = arith.extui %18 : vector<1x256xi1> to vector<1x256xi32>
    %20 = arith.sitofp %19 : vector<1x256xi32> to vector<1x256xf32>
    %c15_i32 = arith.constant 15 : i32
    %21 = vector.broadcast %c15_i32 : i32 to vector<1x256xi32>
    %22 = arith.cmpi slt, %16, %21 : vector<1x256xi32>
    %23 = arith.extui %22 : vector<1x256xi1> to vector<1x256xi32>
    %24 = arith.sitofp %23 : vector<1x256xi32> to vector<1x256xf32>
    %cst = arith.constant 0.000000e+00 : bf16
    %25 = vector.broadcast %cst : bf16 to vector<48x16xbf16>
    %c0 = arith.constant 0 : index
    %c0_4 = arith.constant 0 : index
    %26 = vector.load %arg9[%c0, %c0_4] : memref<48x288xbf16, #tpu.memory_space<vmem>>, vector<48x16xbf16>
    tpu.vector_store %arg9[%c0, %c0_4], %25 {strides = array<i32>} : memref<48x288xbf16, #tpu.memory_space<vmem>>, vector<48x16xbf16>,
    %c0_5 = arith.constant 0 : index
    %c272 = arith.constant 272 : index
    %27 = vector.load %arg9[%c0_5, %c272] : memref<48x288xbf16, #tpu.memory_space<vmem>>, vector<48x16xbf16>
    tpu.vector_store %arg9[%c0_5, %c272], %25 {strides = array<i32>} : memref<48x288xbf16, #tpu.memory_space<vmem>>, vector<48x16xbf16>,
    %c0_6 = arith.constant 0 : index
    %c0_7 = arith.constant 0 : index
    %c0_8 = arith.constant 0 : index
    %28 = vector.load %arg1[%c0_6, %c0_7, %c0_8] : memref<1x16x256xbf16, #tpu.memory_space<vmem>>, vector<1x16x256xbf16>
    %29 = vector.shape_cast %28 : vector<1x16x256xbf16> to vector<16x256xbf16>
    %30 = arith.extf %29 : vector<16x256xbf16> to vector<16x256xf32>
    %31 = arith.mulf %30, %30 : vector<16x256xf32>
    %cst_9 = arith.constant dense<0.000000e+00> : vector<256xf32>
    %32 = vector.multi_reduction <add>, %31, %cst_9 [0] : vector<16x256xf32> to vector<256xf32>
    %33 = vector.shape_cast %32 : vector<256xf32> to vector<1x256xf32>
    %cst_10 = arith.constant 2.500000e-01 : f32
    %34 = vector.broadcast %cst_10 : f32 to vector<1x256xf32>
    %35 = arith.mulf %33, %34 : vector<1x256xf32>
    %cst_11 = arith.constant 9.99999993E-9 : f32
    %36 = vector.broadcast %cst_11 : f32 to vector<1x256xf32>
    %37 = arith.addf %35, %36 : vector<1x256xf32>
    %38 = math.rsqrt %37 : vector<1x256xf32>
    %39 = vector.broadcast %38 : vector<1x256xf32> to vector<16x256xf32>
    %40 = arith.mulf %30, %39 : vector<16x256xf32>
    %cst_12 = arith.constant 2.000000e-01 : f32
    %41 = vector.broadcast %cst_12 : f32 to vector<16x256xf32>
    %42 = arith.mulf %41, %40 : vector<16x256xf32>
    %43 = arith.maximumf %40, %42 : vector<16x256xf32>
    %c0_13 = arith.constant 0 : index
    %c0_14 = arith.constant 0 : index
    %44 = vector.load %arg3[%c0_13, %c0_14] : memref<16x1xf32, #tpu.memory_space<vmem>>, vector<16x1xf32>
    %c1_i32_15 = arith.constant 1 : i32
    %45 = tpu.dynamic_rotate %43 by %c1_i32_15 dim 1 : vector<16x256xf32>, i32 -> vector<16x256xf32>
    %46 = vector.broadcast %20 : vector<1x256xf32> to vector<16x256xf32>
    %47 = arith.mulf %45, %46 : vector<16x256xf32>
    %48 = arith.truncf %47 : vector<16x256xf32> to vector<16x256xbf16>
    %c255_i32 = arith.constant 255 : i32
    %49 = tpu.dynamic_rotate %43 by %c255_i32 dim 1 : vector<16x256xf32>, i32 -> vector<16x256xf32>
    %50 = vector.broadcast %24 : vector<1x256xf32> to vector<16x256xf32>
    %51 = arith.mulf %49, %50 : vector<16x256xf32>
    %52 = arith.truncf %51 : vector<16x256xf32> to vector<16x256xbf16>
    %53 = arith.truncf %43 : vector<16x256xf32> to vector<16x256xbf16>
    %54 = tpu.concatenate %48, %53, %52 in 0 : vector<16x256xbf16>, vector<16x256xbf16>, vector<16x256xbf16> -> vector<48x256xbf16>
    %c0_16 = arith.constant 0 : index
    %c16 = arith.constant 16 : index
    %55 = vector.load %arg9[%c0_16, %c16] : memref<48x288xbf16, #tpu.memory_space<vmem>>, vector<48x256xbf16>
    tpu.vector_store %arg9[%c0_16, %c16], %54 {strides = array<i32>} : memref<48x288xbf16, #tpu.memory_space<vmem>>, vector<48x256xbf16>,
    %c0_17 = arith.constant 0 : index
    %c0_18 = arith.constant 0 : index
    %56 = vector.load %arg9[%c0_17, %c0_18] : memref<48x288xbf16, #tpu.memory_space<vmem>>, vector<48x256xbf16>
    %c0_19 = arith.constant 0 : index
    %c0_20 = arith.constant 0 : index
    %c0_21 = arith.constant 0 : index
    %57 = vector.load %arg2[%c0_19, %c0_20, %c0_21] : memref<3x16x48xbf16, #tpu.memory_space<vmem>>, vector<1x16x48xbf16>
    %58 = vector.shape_cast %57 : vector<1x16x48xbf16> to vector<16x48xbf16>
    %cst_22 = arith.constant dense<0.000000e+00> : vector<16x256xf32>
    %59 = tpu.matmul %58, %56, %cst_22 {dimension_numbers = #tpu.dot_dimension_numbers<[1], [0], [0], [1], [0, 0, 1, 1], [], []>} : vector<16x48xbf16>, vector<48x256xbf16>, vector<16x256xf32> -> vector<16x256xf32>
    %60 = vector.broadcast %44 : vector<16x1xf32> to vector<16x256xf32>
    %61 = arith.addf %60, %59 : vector<16x256xf32>
    %c0_23 = arith.constant 0 : index
    %c16_24 = arith.constant 16 : index
    %62 = vector.load %arg9[%c0_23, %c16_24] : memref<48x288xbf16, #tpu.memory_space<vmem>>, vector<48x256xbf16>
    %c1 = arith.constant 1 : index
    %c0_25 = arith.constant 0 : index
    %c0_26 = arith.constant 0 : index
    %63 = vector.load %arg2[%c1, %c0_25, %c0_26] : memref<3x16x48xbf16, #tpu.memory_space<vmem>>, vector<1x16x48xbf16>
    %64 = vector.shape_cast %63 : vector<1x16x48xbf16> to vector<16x48xbf16>
    %cst_27 = arith.constant dense<0.000000e+00> : vector<16x256xf32>
    %65 = tpu.matmul %64, %62, %cst_27 {dimension_numbers = #tpu.dot_dimension_numbers<[1], [0], [0], [1], [0, 0, 1, 1], [], []>} : vector<16x48xbf16>, vector<48x256xbf16>, vector<16x256xf32> -> vector<16x256xf32>
    %66 = arith.addf %61, %65 : vector<16x256xf32>
    %c0_28 = arith.constant 0 : index
    %c32 = arith.constant 32 : index
    %67 = vector.load %arg9[%c0_28, %c32] : memref<48x288xbf16, #tpu.memory_space<vmem>>, vector<48x256xbf16>
    %c2 = arith.constant 2 : index
    %c0_29 = arith.constant 0 : index
    %c0_30 = arith.constant 0 : index
    %68 = vector.load %arg2[%c2, %c0_29, %c0_30] : memref<3x16x48xbf16, #tpu.memory_space<vmem>>, vector<1x16x48xbf16>
    %69 = vector.shape_cast %68 : vector<1x16x48xbf16> to vector<16x48xbf16>
    %cst_31 = arith.constant dense<0.000000e+00> : vector<16x256xf32>
    %70 = tpu.matmul %69, %67, %cst_31 {dimension_numbers = #tpu.dot_dimension_numbers<[1], [0], [0], [1], [0, 0, 1, 1], [], []>} : vector<16x48xbf16>, vector<48x256xbf16>, vector<16x256xf32> -> vector<16x256xf32>
    %71 = arith.addf %66, %70 : vector<16x256xf32>
    %72 = arith.mulf %71, %71 : vector<16x256xf32>
    %cst_32 = arith.constant dense<0.000000e+00> : vector<256xf32>
    %73 = vector.multi_reduction <add>, %72, %cst_32 [0] : vector<16x256xf32> to vector<256xf32>
    %74 = vector.shape_cast %73 : vector<256xf32> to vector<1x256xf32>
    %cst_33 = arith.constant 2.500000e-01 : f32
    %75 = vector.broadcast %cst_33 : f32 to vector<1x256xf32>
    %76 = arith.mulf %74, %75 : vector<1x256xf32>
    %cst_34 = arith.constant 9.99999993E-9 : f32
    %77 = vector.broadcast %cst_34 : f32 to vector<1x256xf32>
    %78 = arith.addf %76, %77 : vector<1x256xf32>
    %79 = math.rsqrt %78 : vector<1x256xf32>
    %80 = vector.broadcast %79 : vector<1x256xf32> to vector<16x256xf32>
    %81 = arith.mulf %71, %80 : vector<16x256xf32>
    %cst_35 = arith.constant 2.000000e-01 : f32
    %82 = vector.broadcast %cst_35 : f32 to vector<16x256xf32>
    %83 = arith.mulf %82, %81 : vector<16x256xf32>
    %84 = arith.maximumf %81, %83 : vector<16x256xf32>
    %c0_36 = arith.constant 0 : index
    %c0_37 = arith.constant 0 : index
    %85 = vector.load %arg5[%c0_36, %c0_37] : memref<8x1xf32, #tpu.memory_space<vmem>>, vector<8x1xf32>
    %c1_i32_38 = arith.constant 1 : i32
    %86 = tpu.dynamic_rotate %84 by %c1_i32_38 dim 1 : vector<16x256xf32>, i32 -> vector<16x256xf32>
    %87 = vector.broadcast %20 : vector<1x256xf32> to vector<16x256xf32>
    %88 = arith.mulf %86, %87 : vector<16x256xf32>
    %89 = arith.truncf %88 : vector<16x256xf32> to vector<16x256xbf16>
    %c255_i32_39 = arith.constant 255 : i32
    %90 = tpu.dynamic_rotate %84 by %c255_i32_39 dim 1 : vector<16x256xf32>, i32 -> vector<16x256xf32>
    %91 = vector.broadcast %24 : vector<1x256xf32> to vector<16x256xf32>
    %92 = arith.mulf %90, %91 : vector<16x256xf32>
    %93 = arith.truncf %92 : vector<16x256xf32> to vector<16x256xbf16>
    %94 = arith.truncf %84 : vector<16x256xf32> to vector<16x256xbf16>
    %95 = tpu.concatenate %89, %94, %93 in 0 : vector<16x256xbf16>, vector<16x256xbf16>, vector<16x256xbf16> -> vector<48x256xbf16>
    %c0_40 = arith.constant 0 : index
    %c16_41 = arith.constant 16 : index
    %96 = vector.load %arg9[%c0_40, %c16_41] : memref<48x288xbf16, #tpu.memory_space<vmem>>, vector<48x256xbf16>
    tpu.vector_store %arg9[%c0_40, %c16_41], %95 {strides = array<i32>} : memref<48x288xbf16, #tpu.memory_space<vmem>>, vector<48x256xbf16>,
    %c0_42 = arith.constant 0 : index
    %c0_43 = arith.constant 0 : index
    %97 = vector.load %arg9[%c0_42, %c0_43] : memref<48x288xbf16, #tpu.memory_space<vmem>>, vector<48x256xbf16>
    %c0_44 = arith.constant 0 : index
    %c0_45 = arith.constant 0 : index
    %c0_46 = arith.constant 0 : index
    %98 = vector.load %arg4[%c0_44, %c0_45, %c0_46] : memref<3x8x48xbf16, #tpu.memory_space<vmem>>, vector<1x8x48xbf16>
    %99 = vector.shape_cast %98 : vector<1x8x48xbf16> to vector<8x48xbf16>
    %cst_47 = arith.constant dense<0.000000e+00> : vector<8x256xf32>
    %100 = tpu.matmul %99, %97, %cst_47 {dimension_numbers = #tpu.dot_dimension_numbers<[1], [0], [0], [1], [0, 0, 1, 1], [], []>} : vector<8x48xbf16>, vector<48x256xbf16>, vector<8x256xf32> -> vector<8x256xf32>
    %101 = vector.broadcast %85 : vector<8x1xf32> to vector<8x256xf32>
    %102 = arith.addf %101, %100 : vector<8x256xf32>
    %c0_48 = arith.constant 0 : index
    %c16_49 = arith.constant 16 : index
    %103 = vector.load %arg9[%c0_48, %c16_49] : memref<48x288xbf16, #tpu.memory_space<vmem>>, vector<48x256xbf16>
    %c1_50 = arith.constant 1 : index
    %c0_51 = arith.constant 0 : index
    %c0_52 = arith.constant 0 : index
    %104 = vector.load %arg4[%c1_50, %c0_51, %c0_52] : memref<3x8x48xbf16, #tpu.memory_space<vmem>>, vector<1x8x48xbf16>
    %105 = vector.shape_cast %104 : vector<1x8x48xbf16> to vector<8x48xbf16>
    %cst_53 = arith.constant dense<0.000000e+00> : vector<8x256xf32>
    %106 = tpu.matmul %105, %103, %cst_53 {dimension_numbers = #tpu.dot_dimension_numbers<[1], [0], [0], [1], [0, 0, 1, 1], [], []>} : vector<8x48xbf16>, vector<48x256xbf16>, vector<8x256xf32> -> vector<8x256xf32>
    %107 = arith.addf %102, %106 : vector<8x256xf32>
    %c0_54 = arith.constant 0 : index
    %c32_55 = arith.constant 32 : index
    %108 = vector.load %arg9[%c0_54, %c32_55] : memref<48x288xbf16, #tpu.memory_space<vmem>>, vector<48x256xbf16>
    %c2_56 = arith.constant 2 : index
    %c0_57 = arith.constant 0 : index
    %c0_58 = arith.constant 0 : index
    %109 = vector.load %arg4[%c2_56, %c0_57, %c0_58] : memref<3x8x48xbf16, #tpu.memory_space<vmem>>, vector<1x8x48xbf16>
    %110 = vector.shape_cast %109 : vector<1x8x48xbf16> to vector<8x48xbf16>
    %cst_59 = arith.constant dense<0.000000e+00> : vector<8x256xf32>
    %111 = tpu.matmul %110, %108, %cst_59 {dimension_numbers = #tpu.dot_dimension_numbers<[1], [0], [0], [1], [0, 0, 1, 1], [], []>} : vector<8x48xbf16>, vector<48x256xbf16>, vector<8x256xf32> -> vector<8x256xf32>
    %112 = arith.addf %107, %111 : vector<8x256xf32>
    %c0_60 = arith.constant 0 : index
    %c0_61 = arith.constant 0 : index
    %113 = vector.load %arg6[%c0_60, %c0_61] : memref<8x16xbf16, #tpu.memory_space<vmem>>, vector<8x16xbf16>
    %cst_62 = arith.constant dense<0.000000e+00> : vector<8x256xf32>
    %114 = tpu.matmul %113, %29, %cst_62 {dimension_numbers = #tpu.dot_dimension_numbers<[1], [0], [0], [1], [0, 0, 1, 1], [], []>} : vector<8x16xbf16>, vector<16x256xbf16>, vector<8x256xf32> -> vector<8x256xf32>
    %115 = arith.addf %114, %112 : vector<8x256xf32>
    %c0_63 = arith.constant 0 : index
    %c0_64 = arith.constant 0 : index
    %116 = vector.load %arg7[%c0_63, %c0_64] : memref<16x8xf32, #tpu.memory_space<vmem>>, vector<16x8xf32>
    %117 = vector.extract_strided_slice %115 {offsets = [0, 0], sizes = [8, 16], strides = [1, 1]} : vector<8x256xf32> to vector<8x16xf32>
    %118 = vector.extract_strided_slice %115 {offsets = [0, 16], sizes = [8, 16], strides = [1, 1]} : vector<8x256xf32> to vector<8x16xf32>
    %119 = vector.extract_strided_slice %115 {offsets = [0, 32], sizes = [8, 16], strides = [1, 1]} : vector<8x256xf32> to vector<8x16xf32>
    %120 = vector.extract_strided_slice %115 {offsets = [0, 48], sizes = [8, 16], strides = [1, 1]} : vector<8x256xf32> to vector<8x16xf32>
    %121 = vector.extract_strided_slice %115 {offsets = [0, 64], sizes = [8, 16], strides = [1, 1]} : vector<8x256xf32> to vector<8x16xf32>
    %122 = vector.extract_strided_slice %115 {offsets = [0, 80], sizes = [8, 16], strides = [1, 1]} : vector<8x256xf32> to vector<8x16xf32>
    %123 = vector.extract_strided_slice %115 {offsets = [0, 96], sizes = [8, 16], strides = [1, 1]} : vector<8x256xf32> to vector<8x16xf32>
    %124 = vector.extract_strided_slice %115 {offsets = [0, 112], sizes = [8, 16], strides = [1, 1]} : vector<8x256xf32> to vector<8x16xf32>
    %125 = vector.extract_strided_slice %115 {offsets = [0, 128], sizes = [8, 16], strides = [1, 1]} : vector<8x256xf32> to vector<8x16xf32>
    %126 = vector.extract_strided_slice %115 {offsets = [0, 144], sizes = [8, 16], strides = [1, 1]} : vector<8x256xf32> to vector<8x16xf32>
    %127 = vector.extract_strided_slice %115 {offsets = [0, 160], sizes = [8, 16], strides = [1, 1]} : vector<8x256xf32> to vector<8x16xf32>
    %128 = vector.extract_strided_slice %115 {offsets = [0, 176], sizes = [8, 16], strides = [1, 1]} : vector<8x256xf32> to vector<8x16xf32>
    %129 = vector.extract_strided_slice %115 {offsets = [0, 192], sizes = [8, 16], strides = [1, 1]} : vector<8x256xf32> to vector<8x16xf32>
    %130 = vector.extract_strided_slice %115 {offsets = [0, 208], sizes = [8, 16], strides = [1, 1]} : vector<8x256xf32> to vector<8x16xf32>
    %131 = vector.extract_strided_slice %115 {offsets = [0, 224], sizes = [8, 16], strides = [1, 1]} : vector<8x256xf32> to vector<8x16xf32>
    %132 = vector.extract_strided_slice %115 {offsets = [0, 240], sizes = [8, 16], strides = [1, 1]} : vector<8x256xf32> to vector<8x16xf32>
    %cst_65 = arith.constant 3.750000e-01 : f32
    %133 = vector.broadcast %cst_65 : f32 to vector<8x16xf32>
    %134 = arith.mulf %133, %117 : vector<8x16xf32>
    %cst_66 = arith.constant 3.750000e-01 : f32
    %135 = vector.broadcast %cst_66 : f32 to vector<8x16xf32>
    %136 = arith.mulf %135, %118 : vector<8x16xf32>
    %137 = arith.addf %134, %136 : vector<8x16xf32>
    %cst_67 = arith.constant 1.250000e-01 : f32
    %138 = vector.broadcast %cst_67 : f32 to vector<8x16xf32>
    %139 = arith.mulf %138, %119 : vector<8x16xf32>
    %140 = arith.addf %137, %139 : vector<8x16xf32>
    %cst_68 = arith.constant dense<0.000000e+00> : vector<8x8xf32>
    %141 = tpu.matmul %140, %116, %cst_68 {dimension_numbers = #tpu.dot_dimension_numbers<[1], [0], [0], [1], [0, 0, 1, 1], [], []>} : vector<8x16xf32>, vector<16x8xf32>, vector<8x8xf32> -> vector<8x8xf32>
    %cst_69 = arith.constant 1.250000e-01 : f32
    %142 = vector.broadcast %cst_69 : f32 to vector<8x16xf32>
    %143 = arith.mulf %142, %118 : vector<8x16xf32>
    %cst_70 = arith.constant 3.750000e-01 : f32
    %144 = vector.broadcast %cst_70 : f32 to vector<8x16xf32>
    %145 = arith.mulf %144, %119 : vector<8x16xf32>
    %146 = arith.addf %143, %145 : vector<8x16xf32>
    %cst_71 = arith.constant 3.750000e-01 : f32
    %147 = vector.broadcast %cst_71 : f32 to vector<8x16xf32>
    %148 = arith.mulf %147, %120 : vector<8x16xf32>
    %149 = arith.addf %146, %148 : vector<8x16xf32>
    %cst_72 = arith.constant 1.250000e-01 : f32
    %150 = vector.broadcast %cst_72 : f32 to vector<8x16xf32>
    %151 = arith.mulf %150, %121 : vector<8x16xf32>
    %152 = arith.addf %149, %151 : vector<8x16xf32>
    %cst_73 = arith.constant dense<0.000000e+00> : vector<8x8xf32>
    %153 = tpu.matmul %152, %116, %cst_73 {dimension_numbers = #tpu.dot_dimension_numbers<[1], [0], [0], [1], [0, 0, 1, 1], [], []>} : vector<8x16xf32>, vector<16x8xf32>, vector<8x8xf32> -> vector<8x8xf32>
    %cst_74 = arith.constant 1.250000e-01 : f32
    %154 = vector.broadcast %cst_74 : f32 to vector<8x16xf32>
    %155 = arith.mulf %154, %120 : vector<8x16xf32>
    %cst_75 = arith.constant 3.750000e-01 : f32
    %156 = vector.broadcast %cst_75 : f32 to vector<8x16xf32>
    %157 = arith.mulf %156, %121 : vector<8x16xf32>
    %158 = arith.addf %155, %157 : vector<8x16xf32>
    %cst_76 = arith.constant 3.750000e-01 : f32
    %159 = vector.broadcast %cst_76 : f32 to vector<8x16xf32>
    %160 = arith.mulf %159, %122 : vector<8x16xf32>
    %161 = arith.addf %158, %160 : vector<8x16xf32>
    %cst_77 = arith.constant 1.250000e-01 : f32
    %162 = vector.broadcast %cst_77 : f32 to vector<8x16xf32>
    %163 = arith.mulf %162, %123 : vector<8x16xf32>
    %164 = arith.addf %161, %163 : vector<8x16xf32>
    %cst_78 = arith.constant dense<0.000000e+00> : vector<8x8xf32>
    %165 = tpu.matmul %164, %116, %cst_78 {dimension_numbers = #tpu.dot_dimension_numbers<[1], [0], [0], [1], [0, 0, 1, 1], [], []>} : vector<8x16xf32>, vector<16x8xf32>, vector<8x8xf32> -> vector<8x8xf32>
    %cst_79 = arith.constant 1.250000e-01 : f32
    %166 = vector.broadcast %cst_79 : f32 to vector<8x16xf32>
    %167 = arith.mulf %166, %122 : vector<8x16xf32>
    %cst_80 = arith.constant 3.750000e-01 : f32
    %168 = vector.broadcast %cst_80 : f32 to vector<8x16xf32>
    %169 = arith.mulf %168, %123 : vector<8x16xf32>
    %170 = arith.addf %167, %169 : vector<8x16xf32>
    %cst_81 = arith.constant 3.750000e-01 : f32
    %171 = vector.broadcast %cst_81 : f32 to vector<8x16xf32>
    %172 = arith.mulf %171, %124 : vector<8x16xf32>
    %173 = arith.addf %170, %172 : vector<8x16xf32>
    %cst_82 = arith.constant 1.250000e-01 : f32
    %174 = vector.broadcast %cst_82 : f32 to vector<8x16xf32>
    %175 = arith.mulf %174, %125 : vector<8x16xf32>
    %176 = arith.addf %173, %175 : vector<8x16xf32>
    %cst_83 = arith.constant dense<0.000000e+00> : vector<8x8xf32>
    %177 = tpu.matmul %176, %116, %cst_83 {dimension_numbers = #tpu.dot_dimension_numbers<[1], [0], [0], [1], [0, 0, 1, 1], [], []>} : vector<8x16xf32>, vector<16x8xf32>, vector<8x8xf32> -> vector<8x8xf32>
    %cst_84 = arith.constant 1.250000e-01 : f32
    %178 = vector.broadcast %cst_84 : f32 to vector<8x16xf32>
    %179 = arith.mulf %178, %124 : vector<8x16xf32>
    %cst_85 = arith.constant 3.750000e-01 : f32
    %180 = vector.broadcast %cst_85 : f32 to vector<8x16xf32>
    %181 = arith.mulf %180, %125 : vector<8x16xf32>
    %182 = arith.addf %179, %181 : vector<8x16xf32>
    %cst_86 = arith.constant 3.750000e-01 : f32
    %183 = vector.broadcast %cst_86 : f32 to vector<8x16xf32>
    %184 = arith.mulf %183, %126 : vector<8x16xf32>
    %185 = arith.addf %182, %184 : vector<8x16xf32>
    %cst_87 = arith.constant 1.250000e-01 : f32
    %186 = vector.broadcast %cst_87 : f32 to vector<8x16xf32>
    %187 = arith.mulf %186, %127 : vector<8x16xf32>
    %188 = arith.addf %185, %187 : vector<8x16xf32>
    %cst_88 = arith.constant dense<0.000000e+00> : vector<8x8xf32>
    %189 = tpu.matmul %188, %116, %cst_88 {dimension_numbers = #tpu.dot_dimension_numbers<[1], [0], [0], [1], [0, 0, 1, 1], [], []>} : vector<8x16xf32>, vector<16x8xf32>, vector<8x8xf32> -> vector<8x8xf32>
    %cst_89 = arith.constant 1.250000e-01 : f32
    %190 = vector.broadcast %cst_89 : f32 to vector<8x16xf32>
    %191 = arith.mulf %190, %126 : vector<8x16xf32>
    %cst_90 = arith.constant 3.750000e-01 : f32
    %192 = vector.broadcast %cst_90 : f32 to vector<8x16xf32>
    %193 = arith.mulf %192, %127 : vector<8x16xf32>
    %194 = arith.addf %191, %193 : vector<8x16xf32>
    %cst_91 = arith.constant 3.750000e-01 : f32
    %195 = vector.broadcast %cst_91 : f32 to vector<8x16xf32>
    %196 = arith.mulf %195, %128 : vector<8x16xf32>
    %197 = arith.addf %194, %196 : vector<8x16xf32>
    %cst_92 = arith.constant 1.250000e-01 : f32
    %198 = vector.broadcast %cst_92 : f32 to vector<8x16xf32>
    %199 = arith.mulf %198, %129 : vector<8x16xf32>
    %200 = arith.addf %197, %199 : vector<8x16xf32>
    %cst_93 = arith.constant dense<0.000000e+00> : vector<8x8xf32>
    %201 = tpu.matmul %200, %116, %cst_93 {dimension_numbers = #tpu.dot_dimension_numbers<[1], [0], [0], [1], [0, 0, 1, 1], [], []>} : vector<8x16xf32>, vector<16x8xf32>, vector<8x8xf32> -> vector<8x8xf32>
    %cst_94 = arith.constant 1.250000e-01 : f32
    %202 = vector.broadcast %cst_94 : f32 to vector<8x16xf32>
    %203 = arith.mulf %202, %128 : vector<8x16xf32>
    %cst_95 = arith.constant 3.750000e-01 : f32
    %204 = vector.broadcast %cst_95 : f32 to vector<8x16xf32>
    %205 = arith.mulf %204, %129 : vector<8x16xf32>
    %206 = arith.addf %203, %205 : vector<8x16xf32>
    %cst_96 = arith.constant 3.750000e-01 : f32
    %207 = vector.broadcast %cst_96 : f32 to vector<8x16xf32>
    %208 = arith.mulf %207, %130 : vector<8x16xf32>
    %209 = arith.addf %206, %208 : vector<8x16xf32>
    %cst_97 = arith.constant 1.250000e-01 : f32
    %210 = vector.broadcast %cst_97 : f32 to vector<8x16xf32>
    %211 = arith.mulf %210, %131 : vector<8x16xf32>
    %212 = arith.addf %209, %211 : vector<8x16xf32>
    %cst_98 = arith.constant dense<0.000000e+00> : vector<8x8xf32>
    %213 = tpu.matmul %212, %116, %cst_98 {dimension_numbers = #tpu.dot_dimension_numbers<[1], [0], [0], [1], [0, 0, 1, 1], [], []>} : vector<8x16xf32>, vector<16x8xf32>, vector<8x8xf32> -> vector<8x8xf32>
    %cst_99 = arith.constant 1.250000e-01 : f32
    %214 = vector.broadcast %cst_99 : f32 to vector<8x16xf32>
    %215 = arith.mulf %214, %130 : vector<8x16xf32>
    %cst_100 = arith.constant 3.750000e-01 : f32
    %216 = vector.broadcast %cst_100 : f32 to vector<8x16xf32>
    %217 = arith.mulf %216, %131 : vector<8x16xf32>
    %218 = arith.addf %215, %217 : vector<8x16xf32>
    %cst_101 = arith.constant 3.750000e-01 : f32
    %219 = vector.broadcast %cst_101 : f32 to vector<8x16xf32>
    %220 = arith.mulf %219, %132 : vector<8x16xf32>
    %221 = arith.addf %218, %220 : vector<8x16xf32>
    %cst_102 = arith.constant dense<0.000000e+00> : vector<8x8xf32>
    %222 = tpu.matmul %221, %116, %cst_102 {dimension_numbers = #tpu.dot_dimension_numbers<[1], [0], [0], [1], [0, 0, 1, 1], [], []>} : vector<8x16xf32>, vector<16x8xf32>, vector<8x8xf32> -> vector<8x8xf32>
    %223 = tpu.concatenate %141, %153, %165, %177, %189, %201, %213, %222 in 1 : vector<8x8xf32>, vector<8x8xf32>, vector<8x8xf32>, vector<8x8xf32>, vector<8x8xf32>, vector<8x8xf32>, vector<8x8xf32>, vector<8x8xf32> -> vector<8x64xf32>
    %cst_103 = arith.constant 0.707106769 : f32
    %224 = vector.broadcast %cst_103 : f32 to vector<8x64xf32>
    %225 = arith.mulf %224, %223 : vector<8x64xf32>
    %c0_104 = arith.constant 0 : index
    %c0_105 = arith.constant 0 : index
    %c0_106 = arith.constant 0 : index
    %226 = vector.load %arg8[%c0_104, %c0_105, %c0_106] : memref<1x8x64xf32, #tpu.memory_space<vmem>>, vector<1x8x64xf32>
    %227 = vector.shape_cast %226 : vector<1x8x64xf32> to vector<8x64xf32>
    %228 = vector.shape_cast %225 : vector<8x64xf32> to vector<1x8x64xf32>
    tpu.vector_store %arg8[%c0_104, %c0_105, %c0_106], %228 {strides = array<i32>} : memref<1x8x64xf32, #tpu.memory_space<vmem>>, vector<1x8x64xf32>,
    return
  }
  func.func @transform_0(%arg0: i32) -> (i32, i32, i32) {
    %c0_i32 = arith.constant 0 : i32
    %c0_i32_0 = arith.constant 0 : i32
    %c0_i32_1 = arith.constant 0 : i32
    return %arg0, %c0_i32, %c0_i32_0 : i32, i32, i32
  }
  func.func @transform_1(%arg0: i32) -> (i32, i32, i32) {
    %c0_i32 = arith.constant 0 : i32
    %c0_i32_0 = arith.constant 0 : i32
    %c0_i32_1 = arith.constant 0 : i32
    %c0_i32_2 = arith.constant 0 : i32
    return %c0_i32, %c0_i32_0, %c0_i32_1 : i32, i32, i32
  }
  func.func @transform_2(%arg0: i32) -> (i32, i32) {
    %c0_i32 = arith.constant 0 : i32
    %c0_i32_0 = arith.constant 0 : i32
    %c0_i32_1 = arith.constant 0 : i32
    return %c0_i32, %c0_i32_0 : i32, i32
  }
  func.func @transform_3(%arg0: i32) -> (i32, i32, i32) {
    %c0_i32 = arith.constant 0 : i32
    %c0_i32_0 = arith.constant 0 : i32
    %c0_i32_1 = arith.constant 0 : i32
    %c0_i32_2 = arith.constant 0 : i32
    return %c0_i32, %c0_i32_0, %c0_i32_1 : i32, i32, i32
  }
  func.func @transform_4(%arg0: i32) -> (i32, i32) {
    %c0_i32 = arith.constant 0 : i32
    %c0_i32_0 = arith.constant 0 : i32
    %c0_i32_1 = arith.constant 0 : i32
    return %c0_i32, %c0_i32_0 : i32, i32
  }
  func.func @transform_5(%arg0: i32) -> (i32, i32) {
    %c0_i32 = arith.constant 0 : i32
    %c0_i32_0 = arith.constant 0 : i32
    %c0_i32_1 = arith.constant 0 : i32
    return %c0_i32, %c0_i32_0 : i32, i32
  }
  func.func @transform_6(%arg0: i32) -> (i32, i32) {
    %c0_i32 = arith.constant 0 : i32
    %c0_i32_0 = arith.constant 0 : i32
    %c0_i32_1 = arith.constant 0 : i32
    return %c0_i32, %c0_i32_0 : i32, i32
  }
  func.func @transform_7(%arg0: i32) -> (i32, i32, i32) {
    %c0_i32 = arith.constant 0 : i32
    %c0_i32_0 = arith.constant 0 : i32
    %c0_i32_1 = arith.constant 0 : i32
    return %arg0, %c0_i32, %c0_i32_0 : i32, i32, i32
  }
}

</mosaic_0001>

<llo_original>
// kernel: tpu_custom_call.1
$region0: #{tpu_custom_call.1}
  #allocation0 [shape = 'u32[]', space=smem, size = 0x4, offset = 0x4, fixed_abs, tag = 'smem constant byte address 0x4 - core index']
  #allocation1 [shape = 'u32[144,128]{1,0:T(1,128)}', space=vmem, size = 0x12000, scoped, tag = 'internal scratch']
  #allocation2 [shape = 'bf16[48,288]{1,0:T(16,128)(2,1)}', space=vmem, size = 0x9000, scoped, tag = 'scratch operand']
  %s0 = inlined_call_operand.vmem [shape: bf16[2,16,256], index: 0, kind: input, shape index: {}]
  %s1 = inlined_call_operand.hbm [shape: bf16[3,16,48], index: 1, kind: input, shape index: {}]
  %s2 = inlined_call_operand.vmem [shape: f32[16,1], index: 2, kind: input, shape index: {}]
  %s3 = inlined_call_operand.vmem [shape: bf16[3,8,48], index: 3, kind: input, shape index: {}]
  %s4 = inlined_call_operand.vmem [shape: f32[8,1], index: 4, kind: input, shape index: {}]
  %s5 = inlined_call_operand.vmem [shape: bf16[8,16], index: 5, kind: input, shape index: {}]
  %s6 = inlined_call_operand.vmem [shape: f32[16,8], index: 6, kind: input, shape index: {}]
  %s7 = inlined_call_operand.hbm [shape: f32[2,8,64], index: 7, kind: output, shape index: {}]
  %s8 = sld [smem:[#allocation0]]
  $region65: #{tpu_custom_call.1} parent=0
    _
  %s10 = ssub.s32 1, %s8
  %s11 = scalar_select 0, %s10, %s8
  $region1: #{tpu_custom_call.1} parent=0
    #allocation3 [shape = 'u8[12288]{0}', space=vmem, size = 0x3000, scoped, tag = 'input window, operand 1, single buffered']
    #allocation4 [shape = 's32[2]{0}', space=sflag, size = 0x8, scoped, tag = 'scoped memory for tpu_custom_call.1']
    #allocation5 [shape = 's32[2]{0}', space=sflag, size = 0x8, scoped, tag = 'scoped memory for tpu_custom_call.1']
    #allocation6 [shape = 'u8[8192]{0}', space=vmem, size = 0x2000, scoped, tag = 'output window, operand 0']
    %12 = vsyncpa [#allocation4], 0
    %13 = vsyncpa [#allocation5], 0
    %s14 = scalar_lea.sflag [#allocation5], 1
    %15 = vsyncpa %s14, 0
    loop: start=0, step=1, limit=4
    $region2: #{tpu_custom_call.1} parent=1 // loop_pre_header
      _
    $region3: #{tpu_custom_call.1} parent=1 // loop_header
      %s17 = sphi 0, %s21
      %p18 = scmp.ge.s32.totalorder %s17, 4
      %s27 = sphi 0, %s29
      %s30 = sphi 0, %s27
      %s31 = sphi 0, %s30
      %s47 = sphi 0, %s31
      %s51 = sphi 0, %s51
      %s53 = sphi 0, %s51
      %s54 = sphi 0, %s53
      %s68 = sphi 0, %s54
      %s72 = sphi 0, %s72
      %s74 = sphi 0, %s72
      %s75 = sphi 0, %s74
      %s89 = sphi 0, %s75
      %s93 = sphi 0, %s93
      %s95 = sphi 0, %s93
      %s96 = sphi 0, %s95
      %s110 = sphi 0, %s96
      %s114 = sphi 0, %s114
      %s116 = sphi 0, %s114
      %s117 = sphi 0, %s116
      %s131 = sphi 0, %s117
      %s135 = sphi 0, %s135
      %s137 = sphi 0, %s135
      %s138 = sphi 0, %s137
      %s152 = sphi 0, %s138
      %s156 = sphi 0, %s156
      %s158 = sphi 0, %s156
      %s159 = sphi 0, %s158
      %s173 = sphi 0, %s159
      %s179 = sphi 0, %s181
      %s182 = sphi 0, %s179
      %s183 = sphi 0, %s182
      %s199 = sphi 0, %s183
    $region4: #{tpu_custom_call.1} parent=1 // loop_header_branch
      %20 = sbr.rel (%p18) target = $region8
    $region5: #{tpu_custom_call.1} parent=1 // loop_body
      %s22 = ssub.s32 %s17, 1
      %s23 = ssub.s32 %s17, 2
      %s24 = sadd.s32 %s17, 1
      %s25 = ssub.s32 %s17, %s24
      %p26 = scmp.eq.s32.totalorder %s25, 0
      %s28 = sadd.s32 %s27, 1
      %s29 = scalar_select %p26, %s27, %s28
      %p32 = pneg %p26
      %p33 = scmp.eq.s32.totalorder %s17, 1
      %p34 = por %p32, %p33
      %p35 = scmp.ne.s32.totalorder %s27, %s30
      %p36 = scmp.eq.s32.totalorder %s17, 0
      %p37 = por %p35, %p36
      %p38 = scmp.ne.s32.totalorder %s27, %s30
      %p39 = scmp.eq.s32.totalorder %s22, 1
      %p40 = por %p38, %p39
      %p41 = scmp.ne.s32.totalorder %s30, %s31
      %p42 = scmp.eq.s32.totalorder %s22, 0
      %p43 = por %p41, %p42
      %p44 = scmp.ne.s32.totalorder %s30, %s31
      %p45 = scmp.eq.s32.totalorder %s23, 1
      %p46 = por %p44, %p45
      %p48 = scmp.ne.s32.totalorder %s31, %s47
      %p49 = scmp.eq.s32.totalorder %s23, 0
      %p50 = por %p48, %p49
      %s52 = sadd.s32 %s51, 1
      %p55 = scmp.eq.s32.totalorder %s17, 1
      %p56 = scmp.ne.s32.totalorder %s51, %s53
      %p57 = scmp.eq.s32.totalorder %s17, 0
      %p58 = por %p56, %p57
      %p59 = scmp.ne.s32.totalorder %s51, %s53
      %p60 = scmp.eq.s32.totalorder %s22, 1
      %p61 = por %p59, %p60
      %p62 = scmp.ne.s32.totalorder %s53, %s54
      %p63 = scmp.eq.s32.totalorder %s22, 0
      %p64 = por %p62, %p63
      %p65 = scmp.ne.s32.totalorder %s53, %s54
      %p66 = scmp.eq.s32.totalorder %s23, 1
      %p67 = por %p65, %p66
      %p69 = scmp.ne.s32.totalorder %s54, %s68
      %p70 = scmp.eq.s32.totalorder %s23, 0
      %p71 = por %p69, %p70
      %s73 = sadd.s32 %s72, 1
      %p76 = scmp.eq.s32.totalorder %s17, 1
      %p77 = scmp.ne.s32.totalorder %s72, %s74
      %p78 = scmp.eq.s32.totalorder %s17, 0
      %p79 = por %p77, %p78
      %p80 = scmp.ne.s32.totalorder %s72, %s74
      %p81 = scmp.eq.s32.totalorder %s22, 1
      %p82 = por %p80, %p81
      %p83 = scmp.ne.s32.totalorder %s74, %s75
      %p84 = scmp.eq.s32.totalorder %s22, 0
      %p85 = por %p83, %p84
      %p86 = scmp.ne.s32.totalorder %s74, %s75
      %p87 = scmp.eq.s32.totalorder %s23, 1
      %p88 = por %p86, %p87
      %p90 = scmp.ne.s32.totalorder %s75, %s89
      %p91 = scmp.eq.s32.totalorder %s23, 0
      %p92 = por %p90, %p91
      %s94 = sadd.s32 %s93, 1
      %p97 = scmp.eq.s32.totalorder %s17, 1
      %p98 = scmp.ne.s32.totalorder %s93, %s95
      %p99 = scmp.eq.s32.totalorder %s17, 0
      %p100 = por %p98, %p99
      %p101 = scmp.ne.s32.totalorder %s93, %s95
      %p102 = scmp.eq.s32.totalorder %s22, 1
      %p103 = por %p101, %p102
      %p104 = scmp.ne.s32.totalorder %s95, %s96
      %p105 = scmp.eq.s32.totalorder %s22, 0
      %p106 = por %p104, %p105
      %p107 = scmp.ne.s32.totalorder %s95, %s96
      %p108 = scmp.eq.s32.totalorder %s23, 1
      %p109 = por %p107, %p108
      %p111 = scmp.ne.s32.totalorder %s96, %s110
      %p112 = scmp.eq.s32.totalorder %s23, 0
      %p113 = por %p111, %p112
      %s115 = sadd.s32 %s114, 1
      %p118 = scmp.eq.s32.totalorder %s17, 1
      %p119 = scmp.ne.s32.totalorder %s114, %s116
      %p120 = scmp.eq.s32.totalorder %s17, 0
      %p121 = por %p119, %p120
      %p122 = scmp.ne.s32.totalorder %s114, %s116
      %p123 = scmp.eq.s32.totalorder %s22, 1
      %p124 = por %p122, %p123
      %p125 = scmp.ne.s32.totalorder %s116, %s117
      %p126 = scmp.eq.s32.totalorder %s22, 0
      %p127 = por %p125, %p126
      %p128 = scmp.ne.s32.totalorder %s116, %s117
      %p129 = scmp.eq.s32.totalorder %s23, 1
      %p130 = por %p128, %p129
      %p132 = scmp.ne.s32.totalorder %s117, %s131
      %p133 = scmp.eq.s32.totalorder %s23, 0
      %p134 = por %p132, %p133
      %s136 = sadd.s32 %s135, 1
      %p139 = scmp.eq.s32.totalorder %s17, 1
      %p140 = scmp.ne.s32.totalorder %s135, %s137
      %p141 = scmp.eq.s32.totalorder %s17, 0
      %p142 = por %p140, %p141
      %p143 = scmp.ne.s32.totalorder %s135, %s137
      %p144 = scmp.eq.s32.totalorder %s22, 1
      %p145 = por %p143, %p144
      %p146 = scmp.ne.s32.totalorder %s137, %s138
      %p147 = scmp.eq.s32.totalorder %s22, 0
      %p148 = por %p146, %p147
      %p149 = scmp.ne.s32.totalorder %s137, %s138
      %p150 = scmp.eq.s32.totalorder %s23, 1
      %p151 = por %p149, %p150
      %p153 = scmp.ne.s32.totalorder %s138, %s152
      %p154 = scmp.eq.s32.totalorder %s23, 0
      %p155 = por %p153, %p154
      %s157 = sadd.s32 %s156, 1
      %p160 = scmp.eq.s32.totalorder %s17, 1
      %p161 = scmp.ne.s32.totalorder %s156, %s158
      %p162 = scmp.eq.s32.totalorder %s17, 0
      %p163 = por %p161, %p162
      %p164 = scmp.ne.s32.totalorder %s156, %s158
      %p165 = scmp.eq.s32.totalorder %s22, 1
      %p166 = por %p164, %p165
      %p167 = scmp.ne.s32.totalorder %s158, %s159
      %p168 = scmp.eq.s32.totalorder %s22, 0
      %p169 = por %p167, %p168
      %p170 = scmp.ne.s32.totalorder %s158, %s159
      %p171 = scmp.eq.s32.totalorder %s23, 1
      %p172 = por %p170, %p171
      %p174 = scmp.ne.s32.totalorder %s159, %s173
      %p175 = scmp.eq.s32.totalorder %s23, 0
      %p176 = por %p174, %p175
      %s177 = ssub.s32 %s17, %s24
      %p178 = scmp.eq.s32.totalorder %s177, 0
      %s180 = sadd.s32 %s179, 1
      %s181 = scalar_select %p178, %s179, %s180
      %p184 = pneg %p178
      %p185 = scmp.eq.s32.totalorder %s17, 1
      %p186 = por %p184, %p185
      %p187 = scmp.ne.s32.totalorder %s179, %s182
      %p188 = scmp.eq.s32.totalorder %s17, 0
      %p189 = por %p187, %p188
      %p190 = scmp.ne.s32.totalorder %s179, %s182
      %p191 = scmp.eq.s32.totalorder %s22, 1
      %p192 = por %p190, %p191
      %p193 = scmp.ne.s32.totalorder %s182, %s183
      %p194 = scmp.eq.s32.totalorder %s22, 0
      %p195 = por %p193, %p194
      %p196 = scmp.ne.s32.totalorder %s182, %s183
      %p197 = scmp.eq.s32.totalorder %s23, 1
      %p198 = por %p196, %p197
      %p200 = scmp.ne.s32.totalorder %s183, %s199
      %p201 = scmp.eq.s32.totalorder %s23, 0
      %p202 = por %p200, %p201
      %p203 = scmp.le.s32.totalorder 1, %s17
      %p204 = scmp.lt.s32.totalorder %s17, 3
      %p205 = pnand %p203, %p204
      %p206 = pneg %p205
      // Predicated region
      $region9: #{tpu_custom_call.1} parent=5 // pred_check
        _
      $region10: #{tpu_custom_call.1} parent=5 // pred_check_branch
        %208 = sbr.rel (%p205) target = $region12
      $region11: #{tpu_custom_call.1} parent=5 // pred_region
        %s209 = ssub.s32 %s17, 1
        // Predicated region
        $region13: #{tpu_custom_call.1} parent=11 // pred_check
          %p210 = pneg %p64
        $region14: #{tpu_custom_call.1} parent=11 // pred_check_branch
          %212 = sbr.rel (%p210) target = $region16
        $region15: #{tpu_custom_call.1} parent=11 // pred_region
          %s214 = ssub.s32 384, 384
          %215 = vsyncadd [#allocation4], %s214
          %s216 = sshll.u32 [#allocation3], 4
          %s217 = int_to_ptr.vmem [resolvable:$true] %s216
          %222 = dma.hbm_to_vmem [thread:$0]  %s1, 384, %s217, [#allocation4], 64, 64, 4
        $region16: #{tpu_custom_call.1} parent=11 // pred_fallthru
          _
        // Predicated region
        $region17: #{tpu_custom_call.1} parent=11 // pred_check
          %p223 = pneg %p85
        $region18: #{tpu_custom_call.1} parent=11 // pred_check_branch
          %225 = sbr.rel (%p223) target = $region20
        $region19: #{tpu_custom_call.1} parent=11 // pred_region
          _
        $region20: #{tpu_custom_call.1} parent=11 // pred_fallthru
          _
        // Predicated region
        $region21: #{tpu_custom_call.1} parent=11 // pred_check
          %p226 = pneg %p106
        $region22: #{tpu_custom_call.1} parent=11 // pred_check_branch
          %228 = sbr.rel (%p226) target = $region24
        $region23: #{tpu_custom_call.1} parent=11 // pred_region
          _
        $region24: #{tpu_custom_call.1} parent=11 // pred_fallthru
          _
        // Predicated region
        $region25: #{tpu_custom_call.1} parent=11 // pred_check
          %p229 = pneg %p127
        $region26: #{tpu_custom_call.1} parent=11 // pred_check_branch
          %231 = sbr.rel (%p229) target = $region28
        $region27: #{tpu_custom_call.1} parent=11 // pred_region
          _
        $region28: #{tpu_custom_call.1} parent=11 // pred_fallthru
          _
        // Predicated region
        $region29: #{tpu_custom_call.1} parent=11 // pred_check
          %p232 = pneg %p148
        $region30: #{tpu_custom_call.1} parent=11 // pred_check_branch
          %234 = sbr.rel (%p232) target = $region32
        $region31: #{tpu_custom_call.1} parent=11 // pred_region
          _
        $region32: #{tpu_custom_call.1} parent=11 // pred_fallthru
          _
        // Predicated region
        $region33: #{tpu_custom_call.1} parent=11 // pred_check
          %p235 = pneg %p169
        $region34: #{tpu_custom_call.1} parent=11 // pred_check_branch
          %237 = sbr.rel (%p235) target = $region36
        $region35: #{tpu_custom_call.1} parent=11 // pred_region
          _
        $region36: #{tpu_custom_call.1} parent=11 // pred_fallthru
          _
      $region12: #{tpu_custom_call.1} parent=5 // pred_fallthru
        _
      %p238 = scmp.lt.s32.totalorder %s17, 2
      // Predicated region
      $region37: #{tpu_custom_call.1} parent=5 // pred_check
        %p239 = pneg %p238
      $region38: #{tpu_custom_call.1} parent=5 // pred_check_branch
        %241 = sbr.rel (%p239) target = $region40
      $region39: #{tpu_custom_call.1} parent=5 // pred_region
        // Predicated region
        $region41: #{tpu_custom_call.1} parent=39 // pred_check
          %p242 = pneg %p37
        $region42: #{tpu_custom_call.1} parent=39 // pred_check_branch
          %244 = sbr.rel (%p242) target = $region44
        $region43: #{tpu_custom_call.1} parent=39 // pred_region
          %p245 = scmp.lt.s32.totalorder %s17, 1
          %s246 = scalar_select %p245, %s17, 1
          %s247 = smul.addr %s246, 4
          %s248 = smul.addr %s247, 4
          %s249 = scalar_lea.vmem %s0, %s248
        $region44: #{tpu_custom_call.1} parent=39 // pred_fallthru
          _
      $region40: #{tpu_custom_call.1} parent=5 // pred_fallthru
        _
      %p250 = scmp.le.s32.totalorder 1, %s17
      %p251 = scmp.lt.s32.totalorder %s17, 3
      %p252 = pnand %p250, %p251
      %p253 = pneg %p252
      // Predicated region
      $region45: #{tpu_custom_call.1} parent=5 // pred_check
        _
      $region46: #{tpu_custom_call.1} parent=5 // pred_check_branch
        %255 = sbr.rel (%p252) target = $region48
      $region47: #{tpu_custom_call.1} parent=5 // pred_region
        %s256 = ssub.s32 %s17, 1
        // Predicated region
        $region49: #{tpu_custom_call.1} parent=47 // pred_check
          %p257 = pneg %p64
        $region50: #{tpu_custom_call.1} parent=47 // pred_check_branch
          %259 = sbr.rel (%p257) target = $region52
        $region51: #{tpu_custom_call.1} parent=47 // pred_region
          %260 = dma.done [#allocation4], 384
        $region52: #{tpu_custom_call.1} parent=47 // pred_fallthru
          _
        %p261 = scmp.lt.s32.totalorder %s22, 1
        %s262 = scalar_select %p261, %s22, 1
        %s263 = smul.addr %s262, 4
        %s264 = smul.addr %s263, 4
        %s265 = scalar_lea.vmem %s0, %s264
        %p266 = pneg %p43
        %p267 = pneg %p40
        %p268 = pneg %p64
        %p269 = pneg %p61
        %p270 = pneg %p85
        %p271 = pneg %p82
        %p272 = pneg %p106
        %p273 = pneg %p103
        %p274 = pneg %p127
        %p275 = pneg %p124
        %p276 = pneg %p148
        %p277 = pneg %p145
        %p278 = pneg %p169
        %p279 = pneg %p166
        %p280 = pneg %p195
        %p281 = pneg %p192
        %s282 = sand.u32 %s182, 1
        %s283 = scalar_lea.sflag [#allocation5], %s282
        %s284 = sand.u32 %s182, 1
        %s285 = smul.addr %s284, 8
        %s286 = scalar_lea.vmem [#allocation6], %s285
        %p287 = scmp.lt.s32.totalorder %s22, 1
        %s288 = scalar_select %p287, %s22, 1
        %s289 = smul.addr %s288, 4
        %s290 = smul.addr %s289, 4
        %s291 = scalar_lea.vmem %s0, %s290
        %v293 = vlaneseq
        %v294 = vand.u32 %v293, 127
        %v295 = vadd.s32 %v294, 128
        %vm296 = vcmp.lt.s32.totalorder %v294, 0
        %v297 = vsub.s32 0, %v294
        %v298 = vsel %vm296, %v297, %v294
        %v299 = vshrl.u32 %v298, 4
        %v300 = vand.u32 %v298, 15
        %v301 = vsub.s32 0, %v300
        %v302 = vsel %vm296, %v301, %v300
        %vm303 = vcmp.lt.s32.totalorder %v295, 0
        %v304 = vsub.s32 0, %v295
        %v305 = vsel %vm303, %v304, %v295
        %v306 = vshrl.u32 %v305, 4
        %v307 = vand.u32 %v305, 15
        %v308 = vsub.s32 0, %v307
        %v309 = vsel %vm303, %v308, %v307
        %vm310 = vcmp.ne.s32.totalorder %v302, 0
        %vm311 = vcmp.ne.s32.totalorder %v309, 0
        %vm312 = vcmp.lt.s32.totalorder %v302, 0
        %vm313 = vcmp.lt.s32.totalorder %v309, 0
        %vm314 = vmand %vm312, %vm310
        %vm315 = vmand %vm313, %vm311
        %v316 = vadd.s32 %v302, 16
        %v317 = vadd.s32 %v309, 16
        %v318 = vsel %vm314, %v316, %v302
        %v319 = vsel %vm315, %v317, %v309
        %vm320 = vcmp.ge.s32.totalorder %v318, 1
        %vm321 = vcmp.ge.s32.totalorder %v319, 1
        %v322 = vsel %vm320, 1, 0
        %v323 = vsel %vm321, 1, 0
        %v324 = vcvt.s32.f32 %v322
        %v325 = vcvt.s32.f32 %v323
        %vm326 = vcmp.lt.s32.totalorder %v318, 15
        %vm327 = vcmp.lt.s32.totalorder %v319, 15
        %v328 = vsel %vm326, 1, 0
        %v329 = vsel %vm327, 1, 0
        %v330 = vcvt.s32.f32 %v328
        %v331 = vcvt.s32.f32 %v329
        %vm332 = vcmask 130048
        %333 = vst.msk [vmem:[#allocation2] sm:$0xff] %vm332, 0
        %334 = vst.msk [vmem:[#allocation2 + $0x18] sm:$0xff] %vm332, 0
        %335 = vst.msk [vmem:[#allocation2 + $0x30] sm:$0xff] %vm332, 0
        %vm336 = vcmask 261248
        %337 = vst.msk [vmem:[#allocation2 + $0x10] sm:$0xff] %vm336, 0
        %338 = vst.msk [vmem:[#allocation2 + $0x28] sm:$0xff] %vm336, 0
        %339 = vst.msk [vmem:[#allocation2 + $0x40] sm:$0xff] %vm336, 0
        %v340 = vld [vmem:[%s291] sm:$0xff]
        %v341 = vld [vmem:[%s291 + $0x8] sm:$0xff]
        %v342 = vunpack.c.l.bf16 %v340
        %v343 = vunpack.c.h.bf16 %v340
        %v344 = vunpack.c.l.bf16 %v341
        %v345 = vunpack.c.h.bf16 %v341
        %v346 = vmul.f32 %v342, %v342
        %v347 = vmul.f32 %v343, %v343
        %v348 = vmul.f32 %v344, %v344
        %v349 = vmul.f32 %v345, %v345
        %v350 = vadd.f32 %v346, %v348
        %v351 = vrot.slane %v350, 4
        %v352 = vadd.f32 %v350, %v351
        %v353 = vrot.slane %v352, 2
        %v354 = vadd.f32 %v352, %v353
        %v355 = vrot.slane %v354, 1
        %v356 = vadd.f32 %v354, %v355
        %v357 = vadd.f32 %v347, %v349
        %v358 = vrot.slane %v357, 4
        %v359 = vadd.f32 %v357, %v358
        %v360 = vrot.slane %v359, 2
        %v361 = vadd.f32 %v359, %v360
        %v362 = vrot.slane %v361, 1
        %v363 = vadd.f32 %v361, %v362
        %v364 = vmul.f32 %v356, 0.25
        %v365 = vmul.f32 %v363, 0.25
        %v366 = vadd.f32 %v364, 1e-08
        %v367 = vadd.f32 %v365, 1e-08
        %v368 = vrsqrt.pop %v366
        %v369 = vrsqrt.pop %v367
        %v370 = vmul.f32 %v342, %v368
        %v371 = vmul.f32 %v343, %v369
        %v372 = vmul.f32 %v344, %v368
        %v373 = vmul.f32 %v345, %v369
        %v374 = vmul.f32 %v370, 0.2
        %v375 = vmul.f32 %v371, 0.2
        %v376 = vmul.f32 %v372, 0.2
        %v377 = vmul.f32 %v373, 0.2
        %v378 = vmax.f32 %v370, %v374
        %v379 = vmax.f32 %v371, %v375
        %v380 = vmax.f32 %v372, %v376
        %v381 = vmax.f32 %v373, %v377
        %v382 = vld [vmem:[%s2] sm:$0xff]
        %v383 = vld [vmem:[%s2 + $0x8] sm:$0xff]
        %384 = vrot.lane.b32.xlu0 %v378, 1
        %v385 = vpop.permute.xlu0 %384
        %386 = vrot.lane.b32.xlu0 %v380, 1
        %v387 = vpop.permute.xlu0 %386
        %388 = vrot.lane.b32.xlu0 %v379, 1
        %v389 = vpop.permute.xlu0 %388
        %390 = vrot.lane.b32.xlu0 %v381, 1
        %v391 = vpop.permute.xlu0 %390
        %vm392 = vcmp.lt.s32.totalorder %v294, 1
        %v393 = vsel %vm392, %v385, %v389
        %v394 = vsel %vm392, %v387, %v391
        %v395 = vsel %vm392, %v389, %v385
        %v396 = vsel %vm392, %v391, %v387
        %v397 = vmul.f32 %v395, %v324
        %v398 = vmul.f32 %v393, %v325
        %v399 = vmul.f32 %v396, %v324
        %v400 = vmul.f32 %v394, %v325
        %v401 = vpack.c.bf16 %v399, %v397
        %v402 = vpack.c.bf16 %v400, %v398
        %403 = vrot.lane.b32.xlu0 %v378, 127
        %v404 = vpop.permute.xlu0 %403
        %405 = vrot.lane.b32.xlu0 %v380, 127
        %v406 = vpop.permute.xlu0 %405
        %407 = vrot.lane.b32.xlu0 %v379, 127
        %v408 = vpop.permute.xlu0 %407
        %409 = vrot.lane.b32.xlu0 %v381, 127
        %v410 = vpop.permute.xlu0 %409
        %vm411 = vcmp.lt.s32.totalorder %v294, 127
        %v412 = vsel %vm411, %v404, %v408
        %v413 = vsel %vm411, %v406, %v410
        %v414 = vsel %vm411, %v408, %v404
        %v415 = vsel %vm411, %v410, %v406
        %v416 = vmul.f32 %v412, %v330
        %v417 = vmul.f32 %v414, %v331
        %v418 = vmul.f32 %v413, %v330
        %v419 = vmul.f32 %v415, %v331
        %v420 = vpack.c.bf16 %v418, %v416
        %v421 = vpack.c.bf16 %v419, %v417
        %v422 = vpack.c.bf16 %v380, %v378
        %v423 = vpack.c.bf16 %v381, %v379
        %430 = vrot.lane.b32.xlu0 %v401, 16
        %v431 = vpop.permute.xlu0 %430
        %432 = vrot.lane.b32.xlu0 %v402, 16
        %v433 = vpop.permute.xlu0 %432
        %434 = vrot.lane.b32.xlu0 %v422, 16
        %v435 = vpop.permute.xlu0 %434
        %436 = vrot.lane.b32.xlu0 %v423, 16
        %v437 = vpop.permute.xlu0 %436
        %438 = vrot.lane.b32.xlu0 %v420, 16
        %v439 = vpop.permute.xlu0 %438
        %440 = vrot.lane.b32.xlu0 %v421, 16
        %v441 = vpop.permute.xlu0 %440
        %vm442 = vcmask 130048
        %v443 = vsel %vm442, %v431, %v433
        %v444 = vsel %vm442, %v435, %v437
        %v445 = vsel %vm442, %v439, %v441
        %vm455 = vcmask 1047680
        %456 = vst.msk [vmem:[#allocation2] sm:$0xff] %vm455, %v431
        %457 = vst [vmem:[#allocation2 + $0x8] sm:$0xff] %v443
        %458 = vst.msk [vmem:[#allocation2 + $0x10] sm:$0xff] %vm332, %v433
        %459 = vst.msk [vmem:[#allocation2 + $0x18] sm:$0xff] %vm455, %v435
        %460 = vst [vmem:[#allocation2 + $0x20] sm:$0xff] %v444
        %461 = vst.msk [vmem:[#allocation2 + $0x28] sm:$0xff] %vm332, %v437
        %462 = vst.msk [vmem:[#allocation2 + $0x30] sm:$0xff] %vm455, %v439
        %463 = vst [vmem:[#allocation2 + $0x38] sm:$0xff] %v445
        %464 = vst.msk [vmem:[#allocation2 + $0x40] sm:$0xff] %vm332, %v441
        %v465 = vld [vmem:[#allocation2] sm:$0xff]
        %v466 = vld [vmem:[#allocation2 + $0x8] sm:$0xff]
        %v467 = vld [vmem:[#allocation2 + $0x18] sm:$0xff]
        %v468 = vld [vmem:[#allocation2 + $0x20] sm:$0xff]
        %v469 = vld [vmem:[#allocation2 + $0x30] sm:$0xff]
        %v470 = vld [vmem:[#allocation2 + $0x38] sm:$0xff]
        %v471 = vld [vmem:[#allocation3] sm:$0xf]
        %v472 = vld [vmem:[#allocation3 + $0x4] sm:$0xf]
        %v475 = vunpack.c.l.b16 %v471
        %v476 = vunpack.c.l.b16 %v472
        %v477 = vpack.c.b16 %v476, %v475
        %vm478 = vcmask 392192
        %v480 = vsel %vm478, %v477, 0
        %482 = vmatprep.subr.bf16.mxu0 %v466
        %483 = vmatpush1.bf16.msra.mxu0 %v465
        %484 = vmatprep.subr.bf16.mxu0 %v468
        %485 = vmatpush1.bf16.msra.mxu0 %v467
        %486 = vmatprep.subr.bf16.mxu0 %v470
        %487 = vmatpush1.bf16.msra.mxu0 %v469
        %488 = vmatprep.subr.bf16.mxu0 0
        %489 = vmatpush1.bf16.msra.mxu0 0
        %490 = vmatprep.subr.bf16.mxu0 0
        %491 = vmatpush1.bf16.msra.mxu0 0
        %492 = vmatprep.subr.bf16.mxu0 0
        %493 = vmatpush1.bf16.msra.mxu0 0
        %494 = vmatprep.subr.bf16.mxu0 0
        %495 = vmatpush1.bf16.msra.mxu0 0
        %496 = vmatprep.subr.bf16.mxu0 0
        %497 = vmatpush1.bf16.msra.mxu0 0
        %498 = vmatprep.subr.bf16.mxu0 0
        %499 = vmatpush1.bf16.msra.mxu0 0
        %500 = vmatprep.subr.bf16.mxu0 0
        %501 = vmatpush1.bf16.msra.mxu0 0
        %502 = vmatprep.subr.bf16.mxu0 0
        %503 = vmatpush1.bf16.msra.mxu0 0
        %504 = vmatprep.subr.bf16.mxu0 0
        %505 = vmatpush1.bf16.msra.mxu0 0
        %506 = vmatprep.subr.bf16.mxu0 0
        %507 = vmatpush1.bf16.msra.mxu0 0
        %508 = vmatprep.subr.bf16.mxu0 0
        %509 = vmatpush1.bf16.msra.mxu0 0
        %510 = vmatprep.subr.bf16.mxu0 0
        %511 = vmatpush1.bf16.msra.mxu0 0
        %512 = vmatprep.subr.bf16.mxu0 0
        %513 = vmatpush1.bf16.msra.mxu0 0
        %514 = vmatprep.mubr.bf16.mxu0 0
        %515 = vmatmul.mubr.bf16.gmra.mrb[0].mxu0 %v480
        %v516 = vpop.f32.mrb[0].mxu0
        %v517 = vadd.f32 0.0, %v516
        %v518 = vpop.f32.mrb[0].mxu0
        %v519 = vadd.f32 0.0, %v518
        %v520 = vpop.f32.mrb[0].mxu0
        %v521 = vadd.f32 0.0, %v520
        %v522 = vpop.f32.mrb[0].mxu0
        %v523 = vadd.f32 0.0, %v522
        %524 = vdwg.mxu0
        %526 = vset.pattern.permute.xlu0 0
        %527 = vperm.xlu0 %526, %v382
        %v528 = vpop.permute.xlu0 %527
        %531 = vset.pattern.permute.xlu0 0
        %532 = vperm.xlu0 %531, %v383
        %v533 = vpop.permute.xlu0 %532
        %v535 = vadd.f32 %v528, %v517
        %v536 = vadd.f32 %v528, %v519
        %v537 = vadd.f32 %v533, %v521
        %v538 = vadd.f32 %v533, %v523
        %v539 = vld [vmem:[#allocation2] sm:$0xff]
        %v540 = vld [vmem:[#allocation2 + $0x8] sm:$0xff]
        %v541 = vld [vmem:[#allocation2 + $0x10] sm:$0xff]
        %v542 = vld [vmem:[#allocation2 + $0x18] sm:$0xff]
        %v543 = vld [vmem:[#allocation2 + $0x20] sm:$0xff]
        %v544 = vld [vmem:[#allocation2 + $0x28] sm:$0xff]
        %v545 = vld [vmem:[#allocation2 + $0x30] sm:$0xff]
        %v546 = vld [vmem:[#allocation2 + $0x38] sm:$0xff]
        %v547 = vld [vmem:[#allocation2 + $0x40] sm:$0xff]
        %s548 = scalar_lea.vmem [#allocation3], 8
        %v549 = vld [vmem:[%s548] sm:$0xf]
        %v550 = vld [vmem:[%s548 + $0x4] sm:$0xf]
        %v553 = vunpack.c.l.b16 %v549
        %v554 = vunpack.c.l.b16 %v550
        %v555 = vpack.c.b16 %v554, %v553
        %565 = vrot.lane.b32.xlu0 %v539, 112
        %v566 = vpop.permute.xlu0 %565
        %567 = vrot.lane.b32.xlu0 %v540, 112
        %v568 = vpop.permute.xlu0 %567
        %569 = vrot.lane.b32.xlu0 %v541, 112
        %v570 = vpop.permute.xlu0 %569
        %571 = vrot.lane.b32.xlu0 %v542, 112
        %v572 = vpop.permute.xlu0 %571
        %573 = vrot.lane.b32.xlu0 %v543, 112
        %v574 = vpop.permute.xlu0 %573
        %575 = vrot.lane.b32.xlu0 %v544, 112
        %v576 = vpop.permute.xlu0 %575
        %577 = vrot.lane.b32.xlu0 %v545, 112
        %v578 = vpop.permute.xlu0 %577
        %579 = vrot.lane.b32.xlu0 %v546, 112
        %v580 = vpop.permute.xlu0 %579
        %581 = vrot.lane.b32.xlu0 %v547, 112
        %v582 = vpop.permute.xlu0 %581
        %vm583 = vcmask 916480
        %v584 = vsel %vm583, %v566, %v568
        %v585 = vsel %vm583, %v568, %v570
        %v586 = vsel %vm583, %v572, %v574
        %v587 = vsel %vm583, %v574, %v576
        %v588 = vsel %vm583, %v578, %v580
        %v589 = vsel %vm583, %v580, %v582
        %v597 = vsel %vm478, %v555, 0
        %599 = vmatprep.subr.bf16.mxu0 %v585
        %600 = vmatpush1.bf16.msra.mxu0 %v584
        %601 = vmatprep.subr.bf16.mxu0 %v587
        %602 = vmatpush1.bf16.msra.mxu0 %v586
        %603 = vmatprep.subr.bf16.mxu0 %v589
        %604 = vmatpush1.bf16.msra.mxu0 %v588
        %605 = vmatprep.subr.bf16.mxu0 0
        %606 = vmatpush1.bf16.msra.mxu0 0
        %607 = vmatprep.subr.bf16.mxu0 0
        %608 = vmatpush1.bf16.msra.mxu0 0
        %609 = vmatprep.subr.bf16.mxu0 0
        %610 = vmatpush1.bf16.msra.mxu0 0
        %611 = vmatprep.subr.bf16.mxu0 0
        %612 = vmatpush1.bf16.msra.mxu0 0
        %613 = vmatprep.subr.bf16.mxu0 0
        %614 = vmatpush1.bf16.msra.mxu0 0
        %615 = vmatprep.subr.bf16.mxu0 0
        %616 = vmatpush1.bf16.msra.mxu0 0
        %617 = vmatprep.subr.bf16.mxu0 0
        %618 = vmatpush1.bf16.msra.mxu0 0
        %619 = vmatprep.subr.bf16.mxu0 0
        %620 = vmatpush1.bf16.msra.mxu0 0
        %621 = vmatprep.subr.bf16.mxu0 0
        %622 = vmatpush1.bf16.msra.mxu0 0
        %623 = vmatprep.subr.bf16.mxu0 0
        %624 = vmatpush1.bf16.msra.mxu0 0
        %625 = vmatprep.subr.bf16.mxu0 0
        %626 = vmatpush1.bf16.msra.mxu0 0
        %627 = vmatprep.subr.bf16.mxu0 0
        %628 = vmatpush1.bf16.msra.mxu0 0
        %629 = vmatprep.subr.bf16.mxu0 0
        %630 = vmatpush1.bf16.msra.mxu0 0
        %631 = vmatprep.mubr.bf16.mxu0 0
        %632 = vmatmul.mubr.bf16.gmra.mrb[0].mxu0 %v597
        %v633 = vpop.f32.mrb[0].mxu0
        %v634 = vadd.f32 0.0, %v633
        %v635 = vpop.f32.mrb[0].mxu0
        %v636 = vadd.f32 0.0, %v635
        %v637 = vpop.f32.mrb[0].mxu0
        %v638 = vadd.f32 0.0, %v637
        %v639 = vpop.f32.mrb[0].mxu0
        %v640 = vadd.f32 0.0, %v639
        %641 = vdwg.mxu0
        %v642 = vadd.f32 %v535, %v634
        %v643 = vadd.f32 %v536, %v636
        %v644 = vadd.f32 %v537, %v638
        %v645 = vadd.f32 %v538, %v640
        %s646 = scalar_lea.vmem [#allocation3], 16
        %v647 = vld [vmem:[%s646] sm:$0xf]
        %v648 = vld [vmem:[%s646 + $0x4] sm:$0xf]
        %v651 = vunpack.c.l.b16 %v647
        %v652 = vunpack.c.l.b16 %v648
        %v653 = vpack.c.b16 %v652, %v651
        %654 = vrot.lane.b32.xlu0 %v539, 96
        %v655 = vpop.permute.xlu0 %654
        %656 = vrot.lane.b32.xlu0 %v540, 96
        %v657 = vpop.permute.xlu0 %656
        %658 = vrot.lane.b32.xlu0 %v541, 96
        %v659 = vpop.permute.xlu0 %658
        %660 = vrot.lane.b32.xlu0 %v542, 96
        %v661 = vpop.permute.xlu0 %660
        %662 = vrot.lane.b32.xlu0 %v543, 96
        %v663 = vpop.permute.xlu0 %662
        %664 = vrot.lane.b32.xlu0 %v544, 96
        %v665 = vpop.permute.xlu0 %664
        %666 = vrot.lane.b32.xlu0 %v545, 96
        %v667 = vpop.permute.xlu0 %666
        %668 = vrot.lane.b32.xlu0 %v546, 96
        %v669 = vpop.permute.xlu0 %668
        %670 = vrot.lane.b32.xlu0 %v547, 96
        %v671 = vpop.permute.xlu0 %670
        %vm672 = vcmask 785408
        %v673 = vsel %vm672, %v655, %v657
        %v674 = vsel %vm672, %v657, %v659
        %v675 = vsel %vm672, %v661, %v663
        %v676 = vsel %vm672, %v663, %v665
        %v677 = vsel %vm672, %v667, %v669
        %v678 = vsel %vm672, %v669, %v671
        %v686 = vsel %vm478, %v653, 0
        %688 = vmatprep.subr.bf16.mxu0 %v674
        %689 = vmatpush1.bf16.msra.mxu0 %v673
        %690 = vmatprep.subr.bf16.mxu0 %v676
        %691 = vmatpush1.bf16.msra.mxu0 %v675
        %692 = vmatprep.subr.bf16.mxu0 %v678
        %693 = vmatpush1.bf16.msra.mxu0 %v677
        %694 = vmatprep.subr.bf16.mxu0 0
        %695 = vmatpush1.bf16.msra.mxu0 0
        %696 = vmatprep.subr.bf16.mxu0 0
        %697 = vmatpush1.bf16.msra.mxu0 0
        %698 = vmatprep.subr.bf16.mxu0 0
        %699 = vmatpush1.bf16.msra.mxu0 0
        %700 = vmatprep.subr.bf16.mxu0 0
        %701 = vmatpush1.bf16.msra.mxu0 0
        %702 = vmatprep.subr.bf16.mxu0 0
        %703 = vmatpush1.bf16.msra.mxu0 0
        %704 = vmatprep.subr.bf16.mxu0 0
        %705 = vmatpush1.bf16.msra.mxu0 0
        %706 = vmatprep.subr.bf16.mxu0 0
        %707 = vmatpush1.bf16.msra.mxu0 0
        %708 = vmatprep.subr.bf16.mxu0 0
        %709 = vmatpush1.bf16.msra.mxu0 0
        %710 = vmatprep.subr.bf16.mxu0 0
        %711 = vmatpush1.bf16.msra.mxu0 0
        %712 = vmatprep.subr.bf16.mxu0 0
        %713 = vmatpush1.bf16.msra.mxu0 0
        %714 = vmatprep.subr.bf16.mxu0 0
        %715 = vmatpush1.bf16.msra.mxu0 0
        %716 = vmatprep.subr.bf16.mxu0 0
        %717 = vmatpush1.bf16.msra.mxu0 0
        %718 = vmatprep.subr.bf16.mxu0 0
        %719 = vmatpush1.bf16.msra.mxu0 0
        %720 = vmatprep.mubr.bf16.mxu0 0
        %721 = vmatmul.mubr.bf16.gmra.mrb[0].mxu0 %v686
        %v722 = vpop.f32.mrb[0].mxu0
        %v723 = vadd.f32 0.0, %v722
        %v724 = vpop.f32.mrb[0].mxu0
        %v725 = vadd.f32 0.0, %v724
        %v726 = vpop.f32.mrb[0].mxu0
        %v727 = vadd.f32 0.0, %v726
        %v728 = vpop.f32.mrb[0].mxu0
        %v729 = vadd.f32 0.0, %v728
        %730 = vdwg.mxu0
        %v731 = vadd.f32 %v642, %v723
        %v732 = vadd.f32 %v643, %v725
        %v733 = vadd.f32 %v644, %v727
        %v734 = vadd.f32 %v645, %v729
        %v735 = vmul.f32 %v731, %v731
        %v736 = vmul.f32 %v732, %v732
        %v737 = vmul.f32 %v733, %v733
        %v738 = vmul.f32 %v734, %v734
        %v739 = vadd.f32 %v735, %v737
        %v740 = vrot.slane %v739, 4
        %v741 = vadd.f32 %v739, %v740
        %v742 = vrot.slane %v741, 2
        %v743 = vadd.f32 %v741, %v742
        %v744 = vrot.slane %v743, 1
        %v745 = vadd.f32 %v743, %v744
        %v746 = vadd.f32 %v736, %v738
        %v747 = vrot.slane %v746, 4
        %v748 = vadd.f32 %v746, %v747
        %v749 = vrot.slane %v748, 2
        %v750 = vadd.f32 %v748, %v749
        %v751 = vrot.slane %v750, 1
        %v752 = vadd.f32 %v750, %v751
        %v753 = vmul.f32 %v745, 0.25
        %v754 = vmul.f32 %v752, 0.25
        %v755 = vadd.f32 %v753, 1e-08
        %v756 = vadd.f32 %v754, 1e-08
        %v757 = vrsqrt.pop %v755
        %v758 = vrsqrt.pop %v756
        %v759 = vmul.f32 %v731, %v757
        %v760 = vmul.f32 %v732, %v758
        %v761 = vmul.f32 %v733, %v757
        %v762 = vmul.f32 %v734, %v758
        %v763 = vmul.f32 %v759, 0.2
        %v764 = vmul.f32 %v760, 0.2
        %v765 = vmul.f32 %v761, 0.2
        %v766 = vmul.f32 %v762, 0.2
        %v767 = vmax.f32 %v759, %v763
        %v768 = vmax.f32 %v760, %v764
        %v769 = vmax.f32 %v761, %v765
        %v770 = vmax.f32 %v762, %v766
        %v771 = vld [vmem:[%s4] sm:$0xff]
        %772 = vrot.lane.b32.xlu0 %v767, 1
        %v773 = vpop.permute.xlu0 %772
        %774 = vrot.lane.b32.xlu0 %v769, 1
        %v775 = vpop.permute.xlu0 %774
        %776 = vrot.lane.b32.xlu0 %v768, 1
        %v777 = vpop.permute.xlu0 %776
        %778 = vrot.lane.b32.xlu0 %v770, 1
        %v779 = vpop.permute.xlu0 %778
        %v780 = vsel %vm392, %v773, %v777
        %v781 = vsel %vm392, %v775, %v779
        %v782 = vsel %vm392, %v777, %v773
        %v783 = vsel %vm392, %v779, %v775
        %v784 = vmul.f32 %v782, %v324
        %v785 = vmul.f32 %v780, %v325
        %v786 = vmul.f32 %v783, %v324
        %v787 = vmul.f32 %v781, %v325
        %v788 = vpack.c.bf16 %v786, %v784
        %v789 = vpack.c.bf16 %v787, %v785
        %790 = vrot.lane.b32.xlu0 %v767, 127
        %v791 = vpop.permute.xlu0 %790
        %792 = vrot.lane.b32.xlu0 %v769, 127
        %v793 = vpop.permute.xlu0 %792
        %794 = vrot.lane.b32.xlu0 %v768, 127
        %v795 = vpop.permute.xlu0 %794
        %796 = vrot.lane.b32.xlu0 %v770, 127
        %v797 = vpop.permute.xlu0 %796
        %v798 = vsel %vm411, %v791, %v795
        %v799 = vsel %vm411, %v793, %v797
        %v800 = vsel %vm411, %v795, %v791
        %v801 = vsel %vm411, %v797, %v793
        %v802 = vmul.f32 %v798, %v330
        %v803 = vmul.f32 %v800, %v331
        %v804 = vmul.f32 %v799, %v330
        %v805 = vmul.f32 %v801, %v331
        %v806 = vpack.c.bf16 %v804, %v802
        %v807 = vpack.c.bf16 %v805, %v803
        %v808 = vpack.c.bf16 %v769, %v767
        %v809 = vpack.c.bf16 %v770, %v768
        %816 = vrot.lane.b32.xlu0 %v788, 16
        %v817 = vpop.permute.xlu0 %816
        %818 = vrot.lane.b32.xlu0 %v789, 16
        %v819 = vpop.permute.xlu0 %818
        %820 = vrot.lane.b32.xlu0 %v808, 16
        %v821 = vpop.permute.xlu0 %820
        %822 = vrot.lane.b32.xlu0 %v809, 16
        %v823 = vpop.permute.xlu0 %822
        %824 = vrot.lane.b32.xlu0 %v806, 16
        %v825 = vpop.permute.xlu0 %824
        %826 = vrot.lane.b32.xlu0 %v807, 16
        %v827 = vpop.permute.xlu0 %826
        %v828 = vsel %vm442, %v817, %v819
        %v829 = vsel %vm442, %v821, %v823
        %v830 = vsel %vm442, %v825, %v827
        %840 = vst.msk [vmem:[#allocation2] sm:$0xff] %vm455, %v817
        %841 = vst [vmem:[#allocation2 + $0x8] sm:$0xff] %v828
        %842 = vst.msk [vmem:[#allocation2 + $0x10] sm:$0xff] %vm332, %v819
        %843 = vst.msk [vmem:[#allocation2 + $0x18] sm:$0xff] %vm455, %v821
        %844 = vst [vmem:[#allocation2 + $0x20] sm:$0xff] %v829
        %845 = vst.msk [vmem:[#allocation2 + $0x28] sm:$0xff] %vm332, %v823
        %846 = vst.msk [vmem:[#allocation2 + $0x30] sm:$0xff] %vm455, %v825
        %847 = vst [vmem:[#allocation2 + $0x38] sm:$0xff] %v830
        %848 = vst.msk [vmem:[#allocation2 + $0x40] sm:$0xff] %vm332, %v827
        %v849 = vld [vmem:[#allocation2] sm:$0xff]
        %v850 = vld [vmem:[#allocation2 + $0x8] sm:$0xff]
        %v851 = vld [vmem:[#allocation2 + $0x18] sm:$0xff]
        %v852 = vld [vmem:[#allocation2 + $0x20] sm:$0xff]
        %v853 = vld [vmem:[#allocation2 + $0x30] sm:$0xff]
        %v854 = vld [vmem:[#allocation2 + $0x38] sm:$0xff]
        %v855 = vld [vmem:[%s3] sm:$0xf]
        %v857 = vsel %vm478, %v855, 0
        %859 = vmatprep.subr.bf16.mxu0 %v850
        %860 = vmatpush1.bf16.msra.mxu0 %v849
        %861 = vmatprep.subr.bf16.mxu0 %v852
        %862 = vmatpush1.bf16.msra.mxu0 %v851
        %863 = vmatprep.subr.bf16.mxu0 %v854
        %864 = vmatpush1.bf16.msra.mxu0 %v853
        %865 = vmatprep.subr.bf16.mxu0 0
        %866 = vmatpush1.bf16.msra.mxu0 0
        %867 = vmatprep.subr.bf16.mxu0 0
        %868 = vmatpush1.bf16.msra.mxu0 0
        %869 = vmatprep.subr.bf16.mxu0 0
        %870 = vmatpush1.bf16.msra.mxu0 0
        %871 = vmatprep.subr.bf16.mxu0 0
        %872 = vmatpush1.bf16.msra.mxu0 0
        %873 = vmatprep.subr.bf16.mxu0 0
        %874 = vmatpush1.bf16.msra.mxu0 0
        %875 = vmatprep.subr.bf16.mxu0 0
        %876 = vmatpush1.bf16.msra.mxu0 0
        %877 = vmatprep.subr.bf16.mxu0 0
        %878 = vmatpush1.bf16.msra.mxu0 0
        %879 = vmatprep.subr.bf16.mxu0 0
        %880 = vmatpush1.bf16.msra.mxu0 0
        %881 = vmatprep.subr.bf16.mxu0 0
        %882 = vmatpush1.bf16.msra.mxu0 0
        %883 = vmatprep.subr.bf16.mxu0 0
        %884 = vmatpush1.bf16.msra.mxu0 0
        %885 = vmatprep.subr.bf16.mxu0 0
        %886 = vmatpush1.bf16.msra.mxu0 0
        %887 = vmatprep.subr.bf16.mxu0 0
        %888 = vmatpush1.bf16.msra.mxu0 0
        %889 = vmatprep.subr.bf16.mxu0 0
        %890 = vmatpush1.bf16.msra.mxu0 0
        %891 = vmatprep.mubr.bf16.mxu0 0
        %892 = vmatmul.mubr.bf16.gmra.mrb[0].mxu0 %v857
        %v893 = vpop.f32.mrb[0].mxu0
        %v894 = vadd.f32 0.0, %v893
        %v895 = vpop.f32.mrb[0].mxu0
        %v896 = vadd.f32 0.0, %v895
        %v897 = vpop.f32.mrb[0].mxu0
        %v898 = vpop.f32.mrb[0].mxu0
        %899 = vdwg.mxu0
        %901 = vset.pattern.permute.xlu0 0
        %902 = vperm.xlu0 %901, %v771
        %v903 = vpop.permute.xlu0 %902
        %v905 = vadd.f32 %v903, %v894
        %v906 = vadd.f32 %v903, %v896
        %v907 = vld [vmem:[#allocation2] sm:$0xff]
        %v908 = vld [vmem:[#allocation2 + $0x8] sm:$0xff]
        %v909 = vld [vmem:[#allocation2 + $0x10] sm:$0xff]
        %v910 = vld [vmem:[#allocation2 + $0x18] sm:$0xff]
        %v911 = vld [vmem:[#allocation2 + $0x20] sm:$0xff]
        %v912 = vld [vmem:[#allocation2 + $0x28] sm:$0xff]
        %v913 = vld [vmem:[#allocation2 + $0x30] sm:$0xff]
        %v914 = vld [vmem:[#allocation2 + $0x38] sm:$0xff]
        %v915 = vld [vmem:[#allocation2 + $0x40] sm:$0xff]
        %s916 = scalar_lea.vmem %s3, 4
        %v917 = vld [vmem:[%s916] sm:$0xf]
        %927 = vrot.lane.b32.xlu0 %v907, 112
        %v928 = vpop.permute.xlu0 %927
        %929 = vrot.lane.b32.xlu0 %v908, 112
        %v930 = vpop.permute.xlu0 %929
        %931 = vrot.lane.b32.xlu0 %v909, 112
        %v932 = vpop.permute.xlu0 %931
        %933 = vrot.lane.b32.xlu0 %v910, 112
        %v934 = vpop.permute.xlu0 %933
        %935 = vrot.lane.b32.xlu0 %v911, 112
        %v936 = vpop.permute.xlu0 %935
        %937 = vrot.lane.b32.xlu0 %v912, 112
        %v938 = vpop.permute.xlu0 %937
        %939 = vrot.lane.b32.xlu0 %v913, 112
        %v940 = vpop.permute.xlu0 %939
        %941 = vrot.lane.b32.xlu0 %v914, 112
        %v942 = vpop.permute.xlu0 %941
        %943 = vrot.lane.b32.xlu0 %v915, 112
        %v944 = vpop.permute.xlu0 %943
        %v945 = vsel %vm583, %v928, %v930
        %v946 = vsel %vm583, %v930, %v932
        %v947 = vsel %vm583, %v934, %v936
        %v948 = vsel %vm583, %v936, %v938
        %v949 = vsel %vm583, %v940, %v942
        %v950 = vsel %vm583, %v942, %v944
        %v958 = vsel %vm478, %v917, 0
        %960 = vmatprep.subr.bf16.mxu0 %v946
        %961 = vmatpush1.bf16.msra.mxu0 %v945
        %962 = vmatprep.subr.bf16.mxu0 %v948
        %963 = vmatpush1.bf16.msra.mxu0 %v947
        %964 = vmatprep.subr.bf16.mxu0 %v950
        %965 = vmatpush1.bf16.msra.mxu0 %v949
        %966 = vmatprep.subr.bf16.mxu0 0
        %967 = vmatpush1.bf16.msra.mxu0 0
        %968 = vmatprep.subr.bf16.mxu0 0
        %969 = vmatpush1.bf16.msra.mxu0 0
        %970 = vmatprep.subr.bf16.mxu0 0
        %971 = vmatpush1.bf16.msra.mxu0 0
        %972 = vmatprep.subr.bf16.mxu0 0
        %973 = vmatpush1.bf16.msra.mxu0 0
        %974 = vmatprep.subr.bf16.mxu0 0
        %975 = vmatpush1.bf16.msra.mxu0 0
        %976 = vmatprep.subr.bf16.mxu0 0
        %977 = vmatpush1.bf16.msra.mxu0 0
        %978 = vmatprep.subr.bf16.mxu0 0
        %979 = vmatpush1.bf16.msra.mxu0 0
        %980 = vmatprep.subr.bf16.mxu0 0
        %981 = vmatpush1.bf16.msra.mxu0 0
        %982 = vmatprep.subr.bf16.mxu0 0
        %983 = vmatpush1.bf16.msra.mxu0 0
        %984 = vmatprep.subr.bf16.mxu0 0
        %985 = vmatpush1.bf16.msra.mxu0 0
        %986 = vmatprep.subr.bf16.mxu0 0
        %987 = vmatpush1.bf16.msra.mxu0 0
        %988 = vmatprep.subr.bf16.mxu0 0
        %989 = vmatpush1.bf16.msra.mxu0 0
        %990 = vmatprep.subr.bf16.mxu0 0
        %991 = vmatpush1.bf16.msra.mxu0 0
        %992 = vmatprep.mubr.bf16.mxu0 0
        %993 = vmatmul.mubr.bf16.gmra.mrb[0].mxu0 %v958
        %v994 = vpop.f32.mrb[0].mxu0
        %v995 = vadd.f32 0.0, %v994
        %v996 = vpop.f32.mrb[0].mxu0
        %v997 = vadd.f32 0.0, %v996
        %v998 = vpop.f32.mrb[0].mxu0
        %v999 = vpop.f32.mrb[0].mxu0
        %1000 = vdwg.mxu0
        %v1001 = vadd.f32 %v905, %v995
        %v1002 = vadd.f32 %v906, %v997
        %s1003 = scalar_lea.vmem %s3, 8
        %v1004 = vld [vmem:[%s1003] sm:$0xf]
        %1005 = vrot.lane.b32.xlu0 %v907, 96
        %v1006 = vpop.permute.xlu0 %1005
        %1007 = vrot.lane.b32.xlu0 %v908, 96
        %v1008 = vpop.permute.xlu0 %1007
        %1009 = vrot.lane.b32.xlu0 %v909, 96
        %v1010 = vpop.permute.xlu0 %1009
        %1011 = vrot.lane.b32.xlu0 %v910, 96
        %v1012 = vpop.permute.xlu0 %1011
        %1013 = vrot.lane.b32.xlu0 %v911, 96
        %v1014 = vpop.permute.xlu0 %1013
        %1015 = vrot.lane.b32.xlu0 %v912, 96
        %v1016 = vpop.permute.xlu0 %1015
        %1017 = vrot.lane.b32.xlu0 %v913, 96
        %v1018 = vpop.permute.xlu0 %1017
        %1019 = vrot.lane.b32.xlu0 %v914, 96
        %v1020 = vpop.permute.xlu0 %1019
        %1021 = vrot.lane.b32.xlu0 %v915, 96
        %v1022 = vpop.permute.xlu0 %1021
        %v1023 = vsel %vm672, %v1006, %v1008
        %v1024 = vsel %vm672, %v1008, %v1010
        %v1025 = vsel %vm672, %v1012, %v1014
        %v1026 = vsel %vm672, %v1014, %v1016
        %v1027 = vsel %vm672, %v1018, %v1020
        %v1028 = vsel %vm672, %v1020, %v1022
        %v1036 = vsel %vm478, %v1004, 0
        %1038 = vmatprep.subr.bf16.mxu0 %v1024
        %1039 = vmatpush1.bf16.msra.mxu0 %v1023
        %1040 = vmatprep.subr.bf16.mxu0 %v1026
        %1041 = vmatpush1.bf16.msra.mxu0 %v1025
        %1042 = vmatprep.subr.bf16.mxu0 %v1028
        %1043 = vmatpush1.bf16.msra.mxu0 %v1027
        %1044 = vmatprep.subr.bf16.mxu0 0
        %1045 = vmatpush1.bf16.msra.mxu0 0
        %1046 = vmatprep.subr.bf16.mxu0 0
        %1047 = vmatpush1.bf16.msra.mxu0 0
        %1048 = vmatprep.subr.bf16.mxu0 0
        %1049 = vmatpush1.bf16.msra.mxu0 0
        %1050 = vmatprep.subr.bf16.mxu0 0
        %1051 = vmatpush1.bf16.msra.mxu0 0
        %1052 = vmatprep.subr.bf16.mxu0 0
        %1053 = vmatpush1.bf16.msra.mxu0 0
        %1054 = vmatprep.subr.bf16.mxu0 0
        %1055 = vmatpush1.bf16.msra.mxu0 0
        %1056 = vmatprep.subr.bf16.mxu0 0
        %1057 = vmatpush1.bf16.msra.mxu0 0
        %1058 = vmatprep.subr.bf16.mxu0 0
        %1059 = vmatpush1.bf16.msra.mxu0 0
        %1060 = vmatprep.subr.bf16.mxu0 0
        %1061 = vmatpush1.bf16.msra.mxu0 0
        %1062 = vmatprep.subr.bf16.mxu0 0
        %1063 = vmatpush1.bf16.msra.mxu0 0
        %1064 = vmatprep.subr.bf16.mxu0 0
        %1065 = vmatpush1.bf16.msra.mxu0 0
        %1066 = vmatprep.subr.bf16.mxu0 0
        %1067 = vmatpush1.bf16.msra.mxu0 0
        %1068 = vmatprep.subr.bf16.mxu0 0
        %1069 = vmatpush1.bf16.msra.mxu0 0
        %1070 = vmatprep.mubr.bf16.mxu0 0
        %1071 = vmatmul.mubr.bf16.gmra.mrb[0].mxu0 %v1036
        %v1072 = vpop.f32.mrb[0].mxu0
        %v1073 = vadd.f32 0.0, %v1072
        %v1074 = vpop.f32.mrb[0].mxu0
        %v1075 = vadd.f32 0.0, %v1074
        %v1076 = vpop.f32.mrb[0].mxu0
        %v1077 = vpop.f32.mrb[0].mxu0
        %1078 = vdwg.mxu0
        %v1079 = vadd.f32 %v1001, %v1073
        %v1080 = vadd.f32 %v1002, %v1075
        %v1081 = vld [vmem:[%s5] sm:$0xf]
        %v1084 = vunpack.c.l.b16 %v340
        %v1085 = vunpack.c.h.b16 %v340
        %v1086 = vunpack.c.l.b16 %v341
        %v1087 = vunpack.c.h.b16 %v341
        %v1088 = vpack.c.b16 %v1086, %v1084
        %v1089 = vpack.c.b16 %v1087, %v1085
        %v1093 = vsel %vm332, %v1081, 0
        %1095 = vmatprep.subr.bf16.mxu0 %v1089
        %1096 = vmatpush1.bf16.msra.mxu0 %v1088
        %1097 = vmatprep.subr.bf16.mxu0 0
        %1098 = vmatpush1.bf16.msra.mxu0 0
        %1099 = vmatprep.subr.bf16.mxu0 0
        %1100 = vmatpush1.bf16.msra.mxu0 0
        %1101 = vmatprep.subr.bf16.mxu0 0
        %1102 = vmatpush1.bf16.msra.mxu0 0
        %1103 = vmatprep.subr.bf16.mxu0 0
        %1104 = vmatpush1.bf16.msra.mxu0 0
        %1105 = vmatprep.subr.bf16.mxu0 0
        %1106 = vmatpush1.bf16.msra.mxu0 0
        %1107 = vmatprep.subr.bf16.mxu0 0
        %1108 = vmatpush1.bf16.msra.mxu0 0
        %1109 = vmatprep.subr.bf16.mxu0 0
        %1110 = vmatpush1.bf16.msra.mxu0 0
        %1111 = vmatprep.subr.bf16.mxu0 0
        %1112 = vmatpush1.bf16.msra.mxu0 0
        %1113 = vmatprep.subr.bf16.mxu0 0
        %1114 = vmatpush1.bf16.msra.mxu0 0
        %1115 = vmatprep.subr.bf16.mxu0 0
        %1116 = vmatpush1.bf16.msra.mxu0 0
        %1117 = vmatprep.subr.bf16.mxu0 0
        %1118 = vmatpush1.bf16.msra.mxu0 0
        %1119 = vmatprep.subr.bf16.mxu0 0
        %1120 = vmatpush1.bf16.msra.mxu0 0
        %1121 = vmatprep.subr.bf16.mxu0 0
        %1122 = vmatpush1.bf16.msra.mxu0 0
        %1123 = vmatprep.subr.bf16.mxu0 0
        %1124 = vmatpush1.bf16.msra.mxu0 0
        %1125 = vmatprep.subr.bf16.mxu0 0
        %1126 = vmatpush1.bf16.msra.mxu0 0
        %1127 = vmatprep.mubr.bf16.mxu0 0
        %1128 = vmatmul.mubr.bf16.gmra.mrb[0].mxu0 %v1093
        %v1129 = vpop.f32.mrb[0].mxu0
        %v1130 = vadd.f32 %v1079, %v1129
        %v1131 = vpop.f32.mrb[0].mxu0
        %v1132 = vadd.f32 %v1080, %v1131
        %v1133 = vpop.f32.mrb[0].mxu0
        %v1134 = vpop.f32.mrb[0].mxu0
        %1135 = vdwg.mxu0
        %v1136 = vld [vmem:[%s6] sm:$0xff]
        %v1137 = vld [vmem:[%s6 + $0x8] sm:$0xff]
        %v1138 = vmul.f32 %v1130, 0.375
        %1140 = vrot.lane.b32.xlu0 %v1138, 112
        %v1141 = vpop.permute.xlu0 %1140
        %v1143 = vadd.f32 %v1138, %v1141
        %v1144 = vmul.f32 %v1130, 0.125
        %1146 = vrot.lane.b32.xlu0 %v1144, 96
        %v1147 = vpop.permute.xlu0 %1146
        %v1149 = vadd.f32 %v1143, %v1147
        %v1151 = vsel %vm332, %v1149, 0
        %1153 = vmatprep.subr.mxu0 0.0
        %1154 = vmatpush1.msra.mxu0 %v1136
        %1155 = vmatprep.subr.mxu0 0.0
        %1156 = vmatpush1.msra.mxu0 %v1137
        %1157 = vmatprep.subr.mxu0 0.0
        %1158 = vmatpush1.msra.mxu0 0.0
        %1159 = vmatprep.subr.mxu0 0.0
        %1160 = vmatpush1.msra.mxu0 0.0
        %1161 = vmatprep.subr.mxu0 0.0
        %1162 = vmatpush1.msra.mxu0 0.0
        %1163 = vmatprep.subr.mxu0 0.0
        %1164 = vmatpush1.msra.mxu0 0.0
        %1165 = vmatprep.subr.mxu0 0.0
        %1166 = vmatpush1.msra.mxu0 0.0
        %1167 = vmatprep.subr.mxu0 0.0
        %1168 = vmatpush1.msra.mxu0 0.0
        %1169 = vmatprep.subr.mxu0 0.0
        %1170 = vmatpush1.msra.mxu0 0.0
        %1171 = vmatprep.subr.mxu0 0.0
        %1172 = vmatpush1.msra.mxu0 0.0
        %1173 = vmatprep.subr.mxu0 0.0
        %1174 = vmatpush1.msra.mxu0 0.0
        %1175 = vmatprep.subr.mxu0 0.0
        %1176 = vmatpush1.msra.mxu0 0.0
        %1177 = vmatprep.subr.mxu0 0.0
        %1178 = vmatpush1.msra.mxu0 0.0
        %1179 = vmatprep.subr.mxu0 0.0
        %1180 = vmatpush1.msra.mxu0 0.0
        %1181 = vmatprep.subr.mxu0 0.0
        %1182 = vmatpush1.msra.mxu0 0.0
        %1183 = vmatprep.subr.mxu0 0.0
        %1184 = vmatpush1.msra.mxu0 0.0
        %1185 = vmatprep.subr.mxu0 0.0
        %1186 = vmatpush1.msra.mxu0 0.0
        %1187 = vmatprep.subr.mxu0 0.0
        %1188 = vmatpush1.msra.mxu0 0.0
        %1189 = vmatprep.subr.mxu0 0.0
        %1190 = vmatpush1.msra.mxu0 0.0
        %1191 = vmatprep.subr.mxu0 0.0
        %1192 = vmatpush1.msra.mxu0 0.0
        %1193 = vmatprep.subr.mxu0 0.0
        %1194 = vmatpush1.msra.mxu0 0.0
        %1195 = vmatprep.subr.mxu0 0.0
        %1196 = vmatpush1.msra.mxu0 0.0
        %1197 = vmatprep.subr.mxu0 0.0
        %1198 = vmatpush1.msra.mxu0 0.0
        %1199 = vmatprep.subr.mxu0 0.0
        %1200 = vmatpush1.msra.mxu0 0.0
        %1201 = vmatprep.subr.mxu0 0.0
        %1202 = vmatpush1.msra.mxu0 0.0
        %1203 = vmatprep.subr.mxu0 0.0
        %1204 = vmatpush1.msra.mxu0 0.0
        %1205 = vmatprep.subr.mxu0 0.0
        %1206 = vmatpush1.msra.mxu0 0.0
        %1207 = vmatprep.subr.mxu0 0.0
        %1208 = vmatpush1.msra.mxu0 0.0
        %1209 = vmatprep.subr.mxu0 0.0
        %1210 = vmatpush1.msra.mxu0 0.0
        %1211 = vmatprep.subr.mxu0 0.0
        %1212 = vmatpush1.msra.mxu0 0.0
        %1213 = vmatprep.subr.mxu0 0.0
        %1214 = vmatpush1.msra.mxu0 0.0
        %1215 = vmatprep.subr.mxu0 0.0
        %1216 = vmatpush1.msra.mxu0 0.0
        %1217 = vmatprep.mubr.f32.mxu0 0.0
        %1218 = vmatmul.mubr.f32.gmra.mrb[0].mxu0 %v1151
        %v1219 = vpop.f32.mrb[0].mxu0
        %v1220 = vadd.f32 0.0, %v1219
        %v1221 = vpop.f32.mrb[0].mxu0
        %1222 = vdwg.mxu0
        %v1223 = vadd.f32 %v1144, %v1141
        %1224 = vrot.lane.b32.xlu0 %v1138, 96
        %v1225 = vpop.permute.xlu0 %1224
        %v1227 = vadd.f32 %v1223, %v1225
        %1228 = vrot.lane.b32.xlu0 %v1144, 80
        %v1229 = vpop.permute.xlu0 %1228
        %v1231 = vadd.f32 %v1227, %v1229
        %1233 = vrot.lane.b32.xlu0 %v1231, 112
        %v1234 = vpop.permute.xlu0 %1233
        %v1235 = vsel %vm332, %v1234, 0
        %1237 = vmatprep.subr.mxu0 0.0
        %1238 = vmatpush1.msra.mxu0 %v1136
        %1239 = vmatprep.subr.mxu0 0.0
        %1240 = vmatpush1.msra.mxu0 %v1137
        %1241 = vmatprep.subr.mxu0 0.0
        %1242 = vmatpush1.msra.mxu0 0.0
        %1243 = vmatprep.subr.mxu0 0.0
        %1244 = vmatpush1.msra.mxu0 0.0
        %1245 = vmatprep.subr.mxu0 0.0
        %1246 = vmatpush1.msra.mxu0 0.0
        %1247 = vmatprep.subr.mxu0 0.0
        %1248 = vmatpush1.msra.mxu0 0.0
        %1249 = vmatprep.subr.mxu0 0.0
        %1250 = vmatpush1.msra.mxu0 0.0
        %1251 = vmatprep.subr.mxu0 0.0
        %1252 = vmatpush1.msra.mxu0 0.0
        %1253 = vmatprep.subr.mxu0 0.0
        %1254 = vmatpush1.msra.mxu0 0.0
        %1255 = vmatprep.subr.mxu0 0.0
        %1256 = vmatpush1.msra.mxu0 0.0
        %1257 = vmatprep.subr.mxu0 0.0
        %1258 = vmatpush1.msra.mxu0 0.0
        %1259 = vmatprep.subr.mxu0 0.0
        %1260 = vmatpush1.msra.mxu0 0.0
        %1261 = vmatprep.subr.mxu0 0.0
        %1262 = vmatpush1.msra.mxu0 0.0
        %1263 = vmatprep.subr.mxu0 0.0
        %1264 = vmatpush1.msra.mxu0 0.0
        %1265 = vmatprep.subr.mxu0 0.0
        %1266 = vmatpush1.msra.mxu0 0.0
        %1267 = vmatprep.subr.mxu0 0.0
        %1268 = vmatpush1.msra.mxu0 0.0
        %1269 = vmatprep.subr.mxu0 0.0
        %1270 = vmatpush1.msra.mxu0 0.0
        %1271 = vmatprep.subr.mxu0 0.0
        %1272 = vmatpush1.msra.mxu0 0.0
        %1273 = vmatprep.subr.mxu0 0.0
        %1274 = vmatpush1.msra.mxu0 0.0
        %1275 = vmatprep.subr.mxu0 0.0
        %1276 = vmatpush1.msra.mxu0 0.0
        %1277 = vmatprep.subr.mxu0 0.0
        %1278 = vmatpush1.msra.mxu0 0.0
        %1279 = vmatprep.subr.mxu0 0.0
        %1280 = vmatpush1.msra.mxu0 0.0
        %1281 = vmatprep.subr.mxu0 0.0
        %1282 = vmatpush1.msra.mxu0 0.0
        %1283 = vmatprep.subr.mxu0 0.0
        %1284 = vmatpush1.msra.mxu0 0.0
        %1285 = vmatprep.subr.mxu0 0.0
        %1286 = vmatpush1.msra.mxu0 0.0
        %1287 = vmatprep.subr.mxu0 0.0
        %1288 = vmatpush1.msra.mxu0 0.0
        %1289 = vmatprep.subr.mxu0 0.0
        %1290 = vmatpush1.msra.mxu0 0.0
        %1291 = vmatprep.subr.mxu0 0.0
        %1292 = vmatpush1.msra.mxu0 0.0
        %1293 = vmatprep.subr.mxu0 0.0
        %1294 = vmatpush1.msra.mxu0 0.0
        %1295 = vmatprep.subr.mxu0 0.0
        %1296 = vmatpush1.msra.mxu0 0.0
        %1297 = vmatprep.subr.mxu0 0.0
        %1298 = vmatpush1.msra.mxu0 0.0
        %1299 = vmatprep.subr.mxu0 0.0
        %1300 = vmatpush1.msra.mxu0 0.0
        %1301 = vmatprep.mubr.f32.mxu0 0.0
        %1302 = vmatmul.mubr.f32.gmra.mrb[0].mxu0 %v1235
        %v1303 = vpop.f32.mrb[0].mxu0
        %v1304 = vadd.f32 0.0, %v1303
        %v1305 = vpop.f32.mrb[0].mxu0
        %1306 = vdwg.mxu0
        %1307 = vrot.lane.b32.xlu0 %v1231, 80
        %v1308 = vpop.permute.xlu0 %1307
        %v1309 = vsel %vm332, %v1308, 0
        %1311 = vmatprep.subr.mxu0 0.0
        %1312 = vmatpush1.msra.mxu0 %v1136
        %1313 = vmatprep.subr.mxu0 0.0
        %1314 = vmatpush1.msra.mxu0 %v1137
        %1315 = vmatprep.subr.mxu0 0.0
        %1316 = vmatpush1.msra.mxu0 0.0
        %1317 = vmatprep.subr.mxu0 0.0
        %1318 = vmatpush1.msra.mxu0 0.0
        %1319 = vmatprep.subr.mxu0 0.0
        %1320 = vmatpush1.msra.mxu0 0.0
        %1321 = vmatprep.subr.mxu0 0.0
        %1322 = vmatpush1.msra.mxu0 0.0
        %1323 = vmatprep.subr.mxu0 0.0
        %1324 = vmatpush1.msra.mxu0 0.0
        %1325 = vmatprep.subr.mxu0 0.0
        %1326 = vmatpush1.msra.mxu0 0.0
        %1327 = vmatprep.subr.mxu0 0.0
        %1328 = vmatpush1.msra.mxu0 0.0
        %1329 = vmatprep.subr.mxu0 0.0
        %1330 = vmatpush1.msra.mxu0 0.0
        %1331 = vmatprep.subr.mxu0 0.0
        %1332 = vmatpush1.msra.mxu0 0.0
        %1333 = vmatprep.subr.mxu0 0.0
        %1334 = vmatpush1.msra.mxu0 0.0
        %1335 = vmatprep.subr.mxu0 0.0
        %1336 = vmatpush1.msra.mxu0 0.0
        %1337 = vmatprep.subr.mxu0 0.0
        %1338 = vmatpush1.msra.mxu0 0.0
        %1339 = vmatprep.subr.mxu0 0.0
        %1340 = vmatpush1.msra.mxu0 0.0
        %1341 = vmatprep.subr.mxu0 0.0
        %1342 = vmatpush1.msra.mxu0 0.0
        %1343 = vmatprep.subr.mxu0 0.0
        %1344 = vmatpush1.msra.mxu0 0.0
        %1345 = vmatprep.subr.mxu0 0.0
        %1346 = vmatpush1.msra.mxu0 0.0
        %1347 = vmatprep.subr.mxu0 0.0
        %1348 = vmatpush1.msra.mxu0 0.0
        %1349 = vmatprep.subr.mxu0 0.0
        %1350 = vmatpush1.msra.mxu0 0.0
        %1351 = vmatprep.subr.mxu0 0.0
        %1352 = vmatpush1.msra.mxu0 0.0
        %1353 = vmatprep.subr.mxu0 0.0
        %1354 = vmatpush1.msra.mxu0 0.0
        %1355 = vmatprep.subr.mxu0 0.0
        %1356 = vmatpush1.msra.mxu0 0.0
        %1357 = vmatprep.subr.mxu0 0.0
        %1358 = vmatpush1.msra.mxu0 0.0
        %1359 = vmatprep.subr.mxu0 0.0
        %1360 = vmatpush1.msra.mxu0 0.0
        %1361 = vmatprep.subr.mxu0 0.0
        %1362 = vmatpush1.msra.mxu0 0.0
        %1363 = vmatprep.subr.mxu0 0.0
        %1364 = vmatpush1.msra.mxu0 0.0
        %1365 = vmatprep.subr.mxu0 0.0
        %1366 = vmatpush1.msra.mxu0 0.0
        %1367 = vmatprep.subr.mxu0 0.0
        %1368 = vmatpush1.msra.mxu0 0.0
        %1369 = vmatprep.subr.mxu0 0.0
        %1370 = vmatpush1.msra.mxu0 0.0
        %1371 = vmatprep.subr.mxu0 0.0
        %1372 = vmatpush1.msra.mxu0 0.0
        %1373 = vmatprep.subr.mxu0 0.0
        %1374 = vmatpush1.msra.mxu0 0.0
        %1375 = vmatprep.mubr.f32.mxu0 0.0
        %1376 = vmatmul.mubr.f32.gmra.mrb[0].mxu0 %v1309
        %v1377 = vpop.f32.mrb[0].mxu0
        %v1378 = vadd.f32 0.0, %v1377
        %v1379 = vpop.f32.mrb[0].mxu0
        %1380 = vdwg.mxu0
        %v1381 = vmul.f32 %v1132, 0.125
        %1383 = vrot.lane.b32.xlu0 %v1381, 80
        %v1384 = vpop.permute.xlu0 %1383
        %v1386 = vadd.f32 %v1227, %v1384
        %1388 = vrot.lane.b32.xlu0 %v1386, 48
        %v1389 = vpop.permute.xlu0 %1388
        %v1390 = vsel %vm332, %v1389, 0
        %1392 = vmatprep.subr.mxu0 0.0
        %1393 = vmatpush1.msra.mxu0 %v1136
        %1394 = vmatprep.subr.mxu0 0.0
        %1395 = vmatpush1.msra.mxu0 %v1137
        %1396 = vmatprep.subr.mxu0 0.0
        %1397 = vmatpush1.msra.mxu0 0.0
        %1398 = vmatprep.subr.mxu0 0.0
        %1399 = vmatpush1.msra.mxu0 0.0
        %1400 = vmatprep.subr.mxu0 0.0
        %1401 = vmatpush1.msra.mxu0 0.0
        %1402 = vmatprep.subr.mxu0 0.0
        %1403 = vmatpush1.msra.mxu0 0.0
        %1404 = vmatprep.subr.mxu0 0.0
        %1405 = vmatpush1.msra.mxu0 0.0
        %1406 = vmatprep.subr.mxu0 0.0
        %1407 = vmatpush1.msra.mxu0 0.0
        %1408 = vmatprep.subr.mxu0 0.0
        %1409 = vmatpush1.msra.mxu0 0.0
        %1410 = vmatprep.subr.mxu0 0.0
        %1411 = vmatpush1.msra.mxu0 0.0
        %1412 = vmatprep.subr.mxu0 0.0
        %1413 = vmatpush1.msra.mxu0 0.0
        %1414 = vmatprep.subr.mxu0 0.0
        %1415 = vmatpush1.msra.mxu0 0.0
        %1416 = vmatprep.subr.mxu0 0.0
        %1417 = vmatpush1.msra.mxu0 0.0
        %1418 = vmatprep.subr.mxu0 0.0
        %1419 = vmatpush1.msra.mxu0 0.0
        %1420 = vmatprep.subr.mxu0 0.0
        %1421 = vmatpush1.msra.mxu0 0.0
        %1422 = vmatprep.subr.mxu0 0.0
        %1423 = vmatpush1.msra.mxu0 0.0
        %1424 = vmatprep.subr.mxu0 0.0
        %1425 = vmatpush1.msra.mxu0 0.0
        %1426 = vmatprep.subr.mxu0 0.0
        %1427 = vmatpush1.msra.mxu0 0.0
        %1428 = vmatprep.subr.mxu0 0.0
        %1429 = vmatpush1.msra.mxu0 0.0
        %1430 = vmatprep.subr.mxu0 0.0
        %1431 = vmatpush1.msra.mxu0 0.0
        %1432 = vmatprep.subr.mxu0 0.0
        %1433 = vmatpush1.msra.mxu0 0.0
        %1434 = vmatprep.subr.mxu0 0.0
        %1435 = vmatpush1.msra.mxu0 0.0
        %1436 = vmatprep.subr.mxu0 0.0
        %1437 = vmatpush1.msra.mxu0 0.0
        %1438 = vmatprep.subr.mxu0 0.0
        %1439 = vmatpush1.msra.mxu0 0.0
        %1440 = vmatprep.subr.mxu0 0.0
        %1441 = vmatpush1.msra.mxu0 0.0
        %1442 = vmatprep.subr.mxu0 0.0
        %1443 = vmatpush1.msra.mxu0 0.0
        %1444 = vmatprep.subr.mxu0 0.0
        %1445 = vmatpush1.msra.mxu0 0.0
        %1446 = vmatprep.subr.mxu0 0.0
        %1447 = vmatpush1.msra.mxu0 0.0
        %1448 = vmatprep.subr.mxu0 0.0
        %1449 = vmatpush1.msra.mxu0 0.0
        %1450 = vmatprep.subr.mxu0 0.0
        %1451 = vmatpush1.msra.mxu0 0.0
        %1452 = vmatprep.subr.mxu0 0.0
        %1453 = vmatpush1.msra.mxu0 0.0
        %1454 = vmatprep.subr.mxu0 0.0
        %1455 = vmatpush1.msra.mxu0 0.0
        %1456 = vmatprep.mubr.f32.mxu0 0.0
        %1457 = vmatmul.mubr.f32.gmra.mrb[0].mxu0 %v1390
        %v1458 = vpop.f32.mrb[0].mxu0
        %v1459 = vadd.f32 0.0, %v1458
        %v1460 = vpop.f32.mrb[0].mxu0
        %1461 = vdwg.mxu0
        %v1462 = vmul.f32 %v1132, 0.375
        %1464 = vrot.lane.b32.xlu0 %v1462, 112
        %v1465 = vpop.permute.xlu0 %1464
        %v1467 = vadd.f32 %v1144, %v1465
        %1468 = vrot.lane.b32.xlu0 %v1462, 96
        %v1469 = vpop.permute.xlu0 %1468
        %v1471 = vadd.f32 %v1467, %v1469
        %v1472 = vadd.f32 %v1471, %v1384
        %1474 = vrot.lane.b32.xlu0 %v1472, 16
        %v1475 = vpop.permute.xlu0 %1474
        %v1476 = vsel %vm332, %v1475, 0
        %1478 = vmatprep.subr.mxu0 0.0
        %1479 = vmatpush1.msra.mxu0 %v1136
        %1480 = vmatprep.subr.mxu0 0.0
        %1481 = vmatpush1.msra.mxu0 %v1137
        %1482 = vmatprep.subr.mxu0 0.0
        %1483 = vmatpush1.msra.mxu0 0.0
        %1484 = vmatprep.subr.mxu0 0.0
        %1485 = vmatpush1.msra.mxu0 0.0
        %1486 = vmatprep.subr.mxu0 0.0
        %1487 = vmatpush1.msra.mxu0 0.0
        %1488 = vmatprep.subr.mxu0 0.0
        %1489 = vmatpush1.msra.mxu0 0.0
        %1490 = vmatprep.subr.mxu0 0.0
        %1491 = vmatpush1.msra.mxu0 0.0
        %1492 = vmatprep.subr.mxu0 0.0
        %1493 = vmatpush1.msra.mxu0 0.0
        %1494 = vmatprep.subr.mxu0 0.0
        %1495 = vmatpush1.msra.mxu0 0.0
        %1496 = vmatprep.subr.mxu0 0.0
        %1497 = vmatpush1.msra.mxu0 0.0
        %1498 = vmatprep.subr.mxu0 0.0
        %1499 = vmatpush1.msra.mxu0 0.0
        %1500 = vmatprep.subr.mxu0 0.0
        %1501 = vmatpush1.msra.mxu0 0.0
        %1502 = vmatprep.subr.mxu0 0.0
        %1503 = vmatpush1.msra.mxu0 0.0
        %1504 = vmatprep.subr.mxu0 0.0
        %1505 = vmatpush1.msra.mxu0 0.0
        %1506 = vmatprep.subr.mxu0 0.0
        %1507 = vmatpush1.msra.mxu0 0.0
        %1508 = vmatprep.subr.mxu0 0.0
        %1509 = vmatpush1.msra.mxu0 0.0
        %1510 = vmatprep.subr.mxu0 0.0
        %1511 = vmatpush1.msra.mxu0 0.0
        %1512 = vmatprep.subr.mxu0 0.0
        %1513 = vmatpush1.msra.mxu0 0.0
        %1514 = vmatprep.subr.mxu0 0.0
        %1515 = vmatpush1.msra.mxu0 0.0
        %1516 = vmatprep.subr.mxu0 0.0
        %1517 = vmatpush1.msra.mxu0 0.0
        %1518 = vmatprep.subr.mxu0 0.0
        %1519 = vmatpush1.msra.mxu0 0.0
        %1520 = vmatprep.subr.mxu0 0.0
        %1521 = vmatpush1.msra.mxu0 0.0
        %1522 = vmatprep.subr.mxu0 0.0
        %1523 = vmatpush1.msra.mxu0 0.0
        %1524 = vmatprep.subr.mxu0 0.0
        %1525 = vmatpush1.msra.mxu0 0.0
        %1526 = vmatprep.subr.mxu0 0.0
        %1527 = vmatpush1.msra.mxu0 0.0
        %1528 = vmatprep.subr.mxu0 0.0
        %1529 = vmatpush1.msra.mxu0 0.0
        %1530 = vmatprep.subr.mxu0 0.0
        %1531 = vmatpush1.msra.mxu0 0.0
        %1532 = vmatprep.subr.mxu0 0.0
        %1533 = vmatpush1.msra.mxu0 0.0
        %1534 = vmatprep.subr.mxu0 0.0
        %1535 = vmatpush1.msra.mxu0 0.0
        %1536 = vmatprep.subr.mxu0 0.0
        %1537 = vmatpush1.msra.mxu0 0.0
        %1538 = vmatprep.subr.mxu0 0.0
        %1539 = vmatpush1.msra.mxu0 0.0
        %1540 = vmatprep.subr.mxu0 0.0
        %1541 = vmatpush1.msra.mxu0 0.0
        %1542 = vmatprep.mubr.f32.mxu0 0.0
        %1543 = vmatmul.mubr.f32.gmra.mrb[0].mxu0 %v1476
        %v1544 = vpop.f32.mrb[0].mxu0
        %v1545 = vadd.f32 0.0, %v1544
        %v1546 = vpop.f32.mrb[0].mxu0
        %1547 = vdwg.mxu0
        %v1548 = vadd.f32 %v1381, %v1465
        %v1549 = vadd.f32 %v1548, %v1469
        %v1550 = vadd.f32 %v1549, %v1384
        %1552 = vrot.lane.b32.xlu0 %v1550, 112
        %v1553 = vpop.permute.xlu0 %1552
        %v1554 = vsel %vm332, %v1553, 0
        %1556 = vmatprep.subr.mxu0 0.0
        %1557 = vmatpush1.msra.mxu0 %v1136
        %1558 = vmatprep.subr.mxu0 0.0
        %1559 = vmatpush1.msra.mxu0 %v1137
        %1560 = vmatprep.subr.mxu0 0.0
        %1561 = vmatpush1.msra.mxu0 0.0
        %1562 = vmatprep.subr.mxu0 0.0
        %1563 = vmatpush1.msra.mxu0 0.0
        %1564 = vmatprep.subr.mxu0 0.0
        %1565 = vmatpush1.msra.mxu0 0.0
        %1566 = vmatprep.subr.mxu0 0.0
        %1567 = vmatpush1.msra.mxu0 0.0
        %1568 = vmatprep.subr.mxu0 0.0
        %1569 = vmatpush1.msra.mxu0 0.0
        %1570 = vmatprep.subr.mxu0 0.0
        %1571 = vmatpush1.msra.mxu0 0.0
        %1572 = vmatprep.subr.mxu0 0.0
        %1573 = vmatpush1.msra.mxu0 0.0
        %1574 = vmatprep.subr.mxu0 0.0
        %1575 = vmatpush1.msra.mxu0 0.0
        %1576 = vmatprep.subr.mxu0 0.0
        %1577 = vmatpush1.msra.mxu0 0.0
        %1578 = vmatprep.subr.mxu0 0.0
        %1579 = vmatpush1.msra.mxu0 0.0
        %1580 = vmatprep.subr.mxu0 0.0
        %1581 = vmatpush1.msra.mxu0 0.0
        %1582 = vmatprep.subr.mxu0 0.0
        %1583 = vmatpush1.msra.mxu0 0.0
        %1584 = vmatprep.subr.mxu0 0.0
        %1585 = vmatpush1.msra.mxu0 0.0
        %1586 = vmatprep.subr.mxu0 0.0
        %1587 = vmatpush1.msra.mxu0 0.0
        %1588 = vmatprep.subr.mxu0 0.0
        %1589 = vmatpush1.msra.mxu0 0.0
        %1590 = vmatprep.subr.mxu0 0.0
        %1591 = vmatpush1.msra.mxu0 0.0
        %1592 = vmatprep.subr.mxu0 0.0
        %1593 = vmatpush1.msra.mxu0 0.0
        %1594 = vmatprep.subr.mxu0 0.0
        %1595 = vmatpush1.msra.mxu0 0.0
        %1596 = vmatprep.subr.mxu0 0.0
        %1597 = vmatpush1.msra.mxu0 0.0
        %1598 = vmatprep.subr.mxu0 0.0
        %1599 = vmatpush1.msra.mxu0 0.0
        %1600 = vmatprep.subr.mxu0 0.0
        %1601 = vmatpush1.msra.mxu0 0.0
        %1602 = vmatprep.subr.mxu0 0.0
        %1603 = vmatpush1.msra.mxu0 0.0
        %1604 = vmatprep.subr.mxu0 0.0
        %1605 = vmatpush1.msra.mxu0 0.0
        %1606 = vmatprep.subr.mxu0 0.0
        %1607 = vmatpush1.msra.mxu0 0.0
        %1608 = vmatprep.subr.mxu0 0.0
        %1609 = vmatpush1.msra.mxu0 0.0
        %1610 = vmatprep.subr.mxu0 0.0
        %1611 = vmatpush1.msra.mxu0 0.0
        %1612 = vmatprep.subr.mxu0 0.0
        %1613 = vmatpush1.msra.mxu0 0.0
        %1614 = vmatprep.subr.mxu0 0.0
        %1615 = vmatpush1.msra.mxu0 0.0
        %1616 = vmatprep.subr.mxu0 0.0
        %1617 = vmatpush1.msra.mxu0 0.0
        %1618 = vmatprep.subr.mxu0 0.0
        %1619 = vmatpush1.msra.mxu0 0.0
        %1620 = vmatprep.mubr.f32.mxu0 0.0
        %1621 = vmatmul.mubr.f32.gmra.mrb[0].mxu0 %v1554
        %v1622 = vpop.f32.mrb[0].mxu0
        %v1623 = vadd.f32 0.0, %v1622
        %v1624 = vpop.f32.mrb[0].mxu0
        %1625 = vdwg.mxu0
        %1626 = vrot.lane.b32.xlu0 %v1550, 80
        %v1627 = vpop.permute.xlu0 %1626
        %v1628 = vsel %vm332, %v1627, 0
        %1630 = vmatprep.subr.mxu0 0.0
        %1631 = vmatpush1.msra.mxu0 %v1136
        %1632 = vmatprep.subr.mxu0 0.0
        %1633 = vmatpush1.msra.mxu0 %v1137
        %1634 = vmatprep.subr.mxu0 0.0
        %1635 = vmatpush1.msra.mxu0 0.0
        %1636 = vmatprep.subr.mxu0 0.0
        %1637 = vmatpush1.msra.mxu0 0.0
        %1638 = vmatprep.subr.mxu0 0.0
        %1639 = vmatpush1.msra.mxu0 0.0
        %1640 = vmatprep.subr.mxu0 0.0
        %1641 = vmatpush1.msra.mxu0 0.0
        %1642 = vmatprep.subr.mxu0 0.0
        %1643 = vmatpush1.msra.mxu0 0.0
        %1644 = vmatprep.subr.mxu0 0.0
        %1645 = vmatpush1.msra.mxu0 0.0
        %1646 = vmatprep.subr.mxu0 0.0
        %1647 = vmatpush1.msra.mxu0 0.0
        %1648 = vmatprep.subr.mxu0 0.0
        %1649 = vmatpush1.msra.mxu0 0.0
        %1650 = vmatprep.subr.mxu0 0.0
        %1651 = vmatpush1.msra.mxu0 0.0
        %1652 = vmatprep.subr.mxu0 0.0
        %1653 = vmatpush1.msra.mxu0 0.0
        %1654 = vmatprep.subr.mxu0 0.0
        %1655 = vmatpush1.msra.mxu0 0.0
        %1656 = vmatprep.subr.mxu0 0.0
        %1657 = vmatpush1.msra.mxu0 0.0
        %1658 = vmatprep.subr.mxu0 0.0
        %1659 = vmatpush1.msra.mxu0 0.0
        %1660 = vmatprep.subr.mxu0 0.0
        %1661 = vmatpush1.msra.mxu0 0.0
        %1662 = vmatprep.subr.mxu0 0.0
        %1663 = vmatpush1.msra.mxu0 0.0
        %1664 = vmatprep.subr.mxu0 0.0
        %1665 = vmatpush1.msra.mxu0 0.0
        %1666 = vmatprep.subr.mxu0 0.0
        %1667 = vmatpush1.msra.mxu0 0.0
        %1668 = vmatprep.subr.mxu0 0.0
        %1669 = vmatpush1.msra.mxu0 0.0
        %1670 = vmatprep.subr.mxu0 0.0
        %1671 = vmatpush1.msra.mxu0 0.0
        %1672 = vmatprep.subr.mxu0 0.0
        %1673 = vmatpush1.msra.mxu0 0.0
        %1674 = vmatprep.subr.mxu0 0.0
        %1675 = vmatpush1.msra.mxu0 0.0
        %1676 = vmatprep.subr.mxu0 0.0
        %1677 = vmatpush1.msra.mxu0 0.0
        %1678 = vmatprep.subr.mxu0 0.0
        %1679 = vmatpush1.msra.mxu0 0.0
        %1680 = vmatprep.subr.mxu0 0.0
        %1681 = vmatpush1.msra.mxu0 0.0
        %1682 = vmatprep.subr.mxu0 0.0
        %1683 = vmatpush1.msra.mxu0 0.0
        %1684 = vmatprep.subr.mxu0 0.0
        %1685 = vmatpush1.msra.mxu0 0.0
        %1686 = vmatprep.subr.mxu0 0.0
        %1687 = vmatpush1.msra.mxu0 0.0
        %1688 = vmatprep.subr.mxu0 0.0
        %1689 = vmatpush1.msra.mxu0 0.0
        %1690 = vmatprep.subr.mxu0 0.0
        %1691 = vmatpush1.msra.mxu0 0.0
        %1692 = vmatprep.subr.mxu0 0.0
        %1693 = vmatpush1.msra.mxu0 0.0
        %1694 = vmatprep.mubr.f32.mxu0 0.0
        %1695 = vmatmul.mubr.f32.gmra.mrb[0].mxu0 %v1628
        %v1696 = vpop.f32.mrb[0].mxu0
        %v1697 = vadd.f32 0.0, %v1696
        %v1698 = vpop.f32.mrb[0].mxu0
        %1699 = vdwg.mxu0
        %1701 = vrot.lane.b32.xlu0 %v1549, 48
        %v1702 = vpop.permute.xlu0 %1701
        %v1703 = vsel %vm332, %v1702, 0
        %1705 = vmatprep.subr.mxu0 0.0
        %1706 = vmatpush1.msra.mxu0 %v1136
        %1707 = vmatprep.subr.mxu0 0.0
        %1708 = vmatpush1.msra.mxu0 %v1137
        %1709 = vmatprep.subr.mxu0 0.0
        %1710 = vmatpush1.msra.mxu0 0.0
        %1711 = vmatprep.subr.mxu0 0.0
        %1712 = vmatpush1.msra.mxu0 0.0
        %1713 = vmatprep.subr.mxu0 0.0
        %1714 = vmatpush1.msra.mxu0 0.0
        %1715 = vmatprep.subr.mxu0 0.0
        %1716 = vmatpush1.msra.mxu0 0.0
        %1717 = vmatprep.subr.mxu0 0.0
        %1718 = vmatpush1.msra.mxu0 0.0
        %1719 = vmatprep.subr.mxu0 0.0
        %1720 = vmatpush1.msra.mxu0 0.0
        %1721 = vmatprep.subr.mxu0 0.0
        %1722 = vmatpush1.msra.mxu0 0.0
        %1723 = vmatprep.subr.mxu0 0.0
        %1724 = vmatpush1.msra.mxu0 0.0
        %1725 = vmatprep.subr.mxu0 0.0
        %1726 = vmatpush1.msra.mxu0 0.0
        %1727 = vmatprep.subr.mxu0 0.0
        %1728 = vmatpush1.msra.mxu0 0.0
        %1729 = vmatprep.subr.mxu0 0.0
        %1730 = vmatpush1.msra.mxu0 0.0
        %1731 = vmatprep.subr.mxu0 0.0
        %1732 = vmatpush1.msra.mxu0 0.0
        %1733 = vmatprep.subr.mxu0 0.0
        %1734 = vmatpush1.msra.mxu0 0.0
        %1735 = vmatprep.subr.mxu0 0.0
        %1736 = vmatpush1.msra.mxu0 0.0
        %1737 = vmatprep.subr.mxu0 0.0
        %1738 = vmatpush1.msra.mxu0 0.0
        %1739 = vmatprep.subr.mxu0 0.0
        %1740 = vmatpush1.msra.mxu0 0.0
        %1741 = vmatprep.subr.mxu0 0.0
        %1742 = vmatpush1.msra.mxu0 0.0
        %1743 = vmatprep.subr.mxu0 0.0
        %1744 = vmatpush1.msra.mxu0 0.0
        %1745 = vmatprep.subr.mxu0 0.0
        %1746 = vmatpush1.msra.mxu0 0.0
        %1747 = vmatprep.subr.mxu0 0.0
        %1748 = vmatpush1.msra.mxu0 0.0
        %1749 = vmatprep.subr.mxu0 0.0
        %1750 = vmatpush1.msra.mxu0 0.0
        %1751 = vmatprep.subr.mxu0 0.0
        %1752 = vmatpush1.msra.mxu0 0.0
        %1753 = vmatprep.subr.mxu0 0.0
        %1754 = vmatpush1.msra.mxu0 0.0
        %1755 = vmatprep.subr.mxu0 0.0
        %1756 = vmatpush1.msra.mxu0 0.0
        %1757 = vmatprep.subr.mxu0 0.0
        %1758 = vmatpush1.msra.mxu0 0.0
        %1759 = vmatprep.subr.mxu0 0.0
        %1760 = vmatpush1.msra.mxu0 0.0
        %1761 = vmatprep.subr.mxu0 0.0
        %1762 = vmatpush1.msra.mxu0 0.0
        %1763 = vmatprep.subr.mxu0 0.0
        %1764 = vmatpush1.msra.mxu0 0.0
        %1765 = vmatprep.subr.mxu0 0.0
        %1766 = vmatpush1.msra.mxu0 0.0
        %1767 = vmatprep.subr.mxu0 0.0
        %1768 = vmatpush1.msra.mxu0 0.0
        %1769 = vmatprep.mubr.f32.mxu0 0.0
        %1770 = vmatmul.mubr.f32.gmra.mrb[0].mxu0 %v1703
        %v1771 = vpop.f32.mrb[0].mxu0
        %v1772 = vadd.f32 0.0, %v1771
        %v1773 = vpop.f32.mrb[0].mxu0
        %1774 = vdwg.mxu0
        %1776 = vrot.lane.b32.xlu0 %v1304, 8
        %v1777 = vpop.permute.xlu0 %1776
        %1780 = vrot.lane.b32.xlu0 %v1378, 16
        %v1781 = vpop.permute.xlu0 %1780
        %1784 = vrot.lane.b32.xlu0 %v1459, 24
        %v1785 = vpop.permute.xlu0 %1784
        %1788 = vrot.lane.b32.xlu0 %v1545, 32
        %v1789 = vpop.permute.xlu0 %1788
        %1792 = vrot.lane.b32.xlu0 %v1623, 40
        %v1793 = vpop.permute.xlu0 %1792
        %1796 = vrot.lane.b32.xlu0 %v1697, 48
        %v1797 = vpop.permute.xlu0 %1796
        %1800 = vrot.lane.b32.xlu0 %v1772, 56
        %v1801 = vpop.permute.xlu0 %1800
        %vm1803 = vcmask 64512
        %v1804 = vsel %vm1803, %v1220, %v1777
        %v1805 = vsel %vm332, %v1804, %v1781
        %vm1806 = vcmask 195584
        %v1807 = vsel %vm1806, %v1805, %v1785
        %vm1808 = vcmask 261120
        %v1809 = vsel %vm1808, %v1807, %v1789
        %vm1810 = vcmask 326656
        %v1811 = vsel %vm1810, %v1809, %v1793
        %v1812 = vsel %vm478, %v1811, %v1797
        %vm1813 = vcmask 457728
        %v1814 = vsel %vm1813, %v1812, %v1801
        %v1815 = vmul.f32 %v1814, 0.70710677
        %vm1816 = vcmask 523264
        %1817 = vst.msk [vmem:[%s286] sm:$0xff] %vm1816, %v1815
        %s1818 = sand.u32 %s182, 1
        %s1819 = scalar_lea.sflag [#allocation5], %s1818
        %s1820 = sand.u32 %s182, 1
        %s1821 = smul.addr %s1820, 8
        %s1822 = scalar_lea.vmem [#allocation6], %s1821
        // Predicated region
        $region53: #{tpu_custom_call.1} parent=47 // pred_check
          %p1823 = pneg %p192
        $region54: #{tpu_custom_call.1} parent=47 // pred_check_branch
          %1825 = sbr.rel (%p1823) target = $region56
        $region55: #{tpu_custom_call.1} parent=47 // pred_region
          %s1827 = ssub.s32 128, 128
          %1828 = vsyncadd %s1819, %s1827
          %s1829 = smul.addr %s22, 128
          %s1830 = scalar_lea.hbm %s7, %s1829
          %s1832 = sshll.u32 %s1822, 4
          %s1833 = int_to_ptr.vmem [resolvable:$true] %s1832
          %1835 = dma.vmem_to_hbm [thread:$0]  %s1833, 128, %s1830, %s1819
        $region56: #{tpu_custom_call.1} parent=47 // pred_fallthru
          _
      $region48: #{tpu_custom_call.1} parent=5 // pred_fallthru
        _
      %p1836 = scmp.le.s32.totalorder 2, %s17
      // Predicated region
      $region57: #{tpu_custom_call.1} parent=5 // pred_check
        %p1837 = pneg %p1836
      $region58: #{tpu_custom_call.1} parent=5 // pred_check_branch
        %1839 = sbr.rel (%p1837) target = $region60
      $region59: #{tpu_custom_call.1} parent=5 // pred_region
        %s1840 = ssub.s32 %s17, 2
        // Predicated region
        $region61: #{tpu_custom_call.1} parent=59 // pred_check
          %p1841 = pneg %p198
        $region62: #{tpu_custom_call.1} parent=59 // pred_check_branch
          %1843 = sbr.rel (%p1841) target = $region64
        $region63: #{tpu_custom_call.1} parent=59 // pred_region
          %s1844 = sand.u32 %s183, 1
          %s1845 = scalar_lea.sflag [#allocation5], %s1844
          %s1846 = sand.u32 %s183, 1
          %s1847 = smul.addr %s1846, 8
          %s1848 = scalar_lea.vmem [#allocation6], %s1847
          %1849 = dma.done %s1845, 128
        $region64: #{tpu_custom_call.1} parent=59 // pred_fallthru
          _
      $region60: #{tpu_custom_call.1} parent=5 // pred_fallthru
        _
    $region6: #{tpu_custom_call.1} parent=1 // loop_footer
      %s21 = sadd.s32 1, %s17
    $region7: #{tpu_custom_call.1} parent=1 // loop_footer_branch
      %16 = sbr.rel target = $region3
    $region8: #{tpu_custom_call.1} parent=1 // loop_exit
      _
    %1850 = vsyncpa [#allocation4], 1
    %s1851 = scalar_lea.sflag [#allocation4], 1
    %1852 = vsyncpa %s1851, 1
    %1853 = vsyncpa [#allocation5], 1
    %s1854 = scalar_lea.sflag [#allocation5], 1
    %1855 = vsyncpa %s1854, 1

</llo_original>
